<compile_context>
chip_gen: v7x
topology: tpu7x:2x2x1
jax: 0.10.0
libtpu: 0.0.40
codegen_flags: <defaults>
</compile_context>

<pallas_src>
import numpy as np
import jax
import jax.numpy as jnp
from jax.experimental import pallas as pl
from jax.experimental.pallas import tpu as pltpu

_EPS = 1e-5


# --------------------------------------------------------------------------------------
# Small host-side helpers
# --------------------------------------------------------------------------------------
def _vmem_limit_bytes() -> int:
    """Generation-aware scoped-VMEM limit (v7x has 64 MiB, v5e/v6e 128 MiB)."""
    cap = 64 * 1024 * 1024
    try:
        info = pltpu.get_tpu_info()
        cap = int(getattr(info, "vmem_capacity_bytes", cap))
    except Exception:
        pass
    return int(min(cap * 0.7, 100 * 1024 * 1024))


def _bilinear_matrix(out_size: int, in_size: int) -> np.ndarray:
    """Row-stochastic 1-D interpolation matrix reproducing
    F.upsample(..., mode='bilinear') with align_corners=False along one axis."""
    # TODO(synk): very old PyTorch upsample behaved like align_corners=True; adjust the
    # source-coordinate formula here if matching such a checkpoint.
    m = np.zeros((out_size, in_size), dtype=np.float32)
    scale = in_size / out_size
    for o in range(out_size):
        src = max((o + 0.5) * scale - 0.5, 0.0)
        i0 = min(int(np.floor(src)), in_size - 1)
        i1 = min(i0 + 1, in_size - 1)
        frac = src - i0
        m[o, i0] += 1.0 - frac
        m[o, i1] += frac
    return m


def _full_spec(shape):
    """Whole-array block (weights / tiny params); constant index -> fetched once."""
    n = len(shape)
    return pl.BlockSpec(shape, lambda *_: (0,) * n)


def _choose_pixel_tile(hw: int, cap: int):
    """Lane-dense pixel tile (multiple of 128) <= cap, minimizing zero-padding.
    Returns (tile, padded_hw)."""
    cap = max(128, (cap // 128) * 128)
    hw128 = ((hw + 127) // 128) * 128
    if hw128 <= cap:
        return hw128, hw128
    best_t, best_pad = cap, (-hw) % cap
    t = cap - 128
    while t >= 128 and best_pad:
        p = (-hw) % t
        if p < best_pad:
            best_t, best_pad = t, p
        t -= 128
    return best_t, hw + best_pad


def _pick_row_tile(hs: int, ws: int, bytes_per_row: int, budget: int) -> int:
    """Row tile for kernel 1: a divisor of Hs with a lane-friendly rt*Ws and a
    bounded VMEM footprint."""
    divs = [d for d in range(1, hs + 1)
            if hs % d == 0 and (d == hs or (d * ws) % 128 == 0)]
    fits = [d for d in divs if d * bytes_per_row <= budget]
    return max(fits) if fits else min(divs)


# --------------------------------------------------------------------------------------
# Kernel 1: low-resolution attention map, tiled over rows of the sub-sampled image.
# --------------------------------------------------------------------------------------
def _attention_kernel(xsub_ref, g_ref, wth_ref, wphi_ref, bphi_ref,
                      wpsi_ref, bpsi_ref, ugh_ref, ugwT_ref,
                      att_ref, r_ref):
    t = pl.program_id(1)
    ci = wphi_ref.shape[0]
    wg, ws = ugwT_ref.shape
    n_hg = ugh_ref.shape[1]
    trow = xsub_ref.shape[1]
    rt = trow // ws

    # Once per batch: phi(g) (1x1 conv) + W-axis bilinear upsample into VMEM scratch.
    @pl.when(t == 0)
    def _():
        phi = jnp.dot(wphi_ref[...], g_ref[...],
                      preferred_element_type=jnp.float32) + bphi_ref[...]   # (Ci, Pg)
        for h in range(n_hg):   # Hg is small & static -> unrolled tiny matmuls
            r_ref[h] = jnp.dot(phi[:, h * wg:(h + 1) * wg], ugwT_ref[...],
                               preferred_element_type=jnp.float32)          # (Ci, Ws)

    # theta(x): 2x2 / stride-2 conv as one channels-first matmul (bf16 MXU, f32 acc).
    theta = jnp.dot(wth_ref[...], xsub_ref[...],
                    preferred_element_type=jnp.float32)                      # (Ci, Trow)

    # H-axis bilinear combine of the pre-upsampled gate for this row tile.
    ugh_rows = ugh_ref[pl.ds(t * rt, rt), :]                                 # (rt, Hg)
    phi_up = jnp.zeros((ci, rt, ws), jnp.float32)
    for h in range(n_hg):  # Hg small & static -> unrolled broadcast-accumulate
        phi_up = phi_up + (ugh_rows[:, h:h + 1].reshape(1, rt, 1) *
                           r_ref[h].reshape(ci, 1, ws))

    f = jnp.maximum(theta + phi_up.reshape(ci, trow), 0.0)                   # (Ci, Trow)

    # psi: single-output-channel 1x1 conv on the VPU (sublane reduce), then sigmoid.
    att_ref[...] = jax.nn.sigmoid(
        jnp.sum(wpsi_ref[...] * f, axis=0, keepdims=True) + bpsi_ref[...])   # (1, Trow)


# --------------------------------------------------------------------------------------
# Kernel 1b: separable bilinear upsample of the attention map to full resolution.
# --------------------------------------------------------------------------------------
def _upsample_kernel(alow_ref, uh_ref, uwT_ref, att_ref, attbf_ref):
    a = jnp.dot(uh_ref[...], alow_ref[...], preferred_element_type=jnp.float32)  # (H, Ws)
    full = jnp.dot(a, uwT_ref[...], preferred_element_type=jnp.float32)          # (H, W)
    att_ref[...] = full
    attbf_ref[...] = full.astype(jnp.bfloat16)


# --------------------------------------------------------------------------------------
# Kernel 2: first/second moments of y = att * x, accumulated in-kernel over pixel tiles.
# --------------------------------------------------------------------------------------
def _moments_kernel(x_ref, att_ref, sumy_ref, yyT_ref):
    @pl.when(pl.program_id(1) == 0)
    def _():
        sumy_ref[...] = jnp.zeros_like(sumy_ref)
        yyT_ref[...] = jnp.zeros_like(yyT_ref)

    y = att_ref[...] * x_ref[...]                                            # bf16 (C, T)
    sumy_ref[...] += jnp.sum(y.astype(jnp.float32), axis=1, keepdims=True)   # (C, 1)
    yyT_ref[...] += jax.lax.dot_general(                                     # (C, C)
        y, y, dimension_numbers=(((1,), (1,)), ((), ())),
        preferred_element_type=jnp.float32)


# --------------------------------------------------------------------------------------
# Kernel 3: apply the collapsed affine map (W conv + BN + combine conv + BN) + ReLU.
# --------------------------------------------------------------------------------------
def _apply_kernel(x_ref, att_ref, a_ref, d_ref, out_ref):
    y = att_ref[...] * x_ref[...]                                            # bf16 (C, T)
    cg = jnp.dot(a_ref[...], y, preferred_element_type=jnp.float32)          # (C, T)
    out_ref[...] = jnp.maximum(cg + d_ref[...], 0.0)


# --------------------------------------------------------------------------------------
# Wrapper
# --------------------------------------------------------------------------------------
def multi_attention_block(x_nchw, g_nchw, params):
    """Forward of MultiAttentionBlock (mode='concatenation').
    x_nchw: (B, C, H, W)   g_nchw: (B, Cg, Hg, Wg)
    Returns (out, attention) in PyTorch layout: (B, C, H, W), (B, 1, H, W)."""
    f32, bf16 = jnp.float32, jnp.bfloat16
    B, C, H, W = x_nchw.shape
    _, Cg, Hg, Wg = g_nchw.shape
    assert H % 2 == 0 and W % 2 == 0, "sub_sample_factor=(2,2) needs even H, W"
    Hs, Ws = H // 2, W // 2
    P, Pg, HW = Hs * Ws, Hg * Wg, H * W
    Ci = params["w_theta"].shape[0]

    vmem_limit = _vmem_limit_bytes()

    def cparams(sem):
        return pltpu.CompilerParams(dimension_semantics=sem,
                                    vmem_limit_bytes=vmem_limit)

    # bf16 storage for the bandwidth-bound kernels (cast once; f32 accumulation inside).
    x_bf = x_nchw.astype(bf16)
    g_cf = g_nchw.astype(f32).reshape(B, Cg, Pg)
    x_cf = x_bf.reshape(B, C, HW)
    # stride-2 2x2 patches stacked on the channel axis (emitted directly in bf16).
    x_sub = (x_bf.reshape(B, C, Hs, 2, Ws, 2)
             .transpose(0, 3, 5, 1, 2, 4)
             .reshape(B, 4 * C, P))
    w_theta_bf = (params["w_theta"].astype(f32).transpose(0, 2, 3, 1)
                  .reshape(Ci, 4 * C).astype(bf16))            # hoisted bf16 cast

    # Per-axis bilinear matrices (separable -- no Kronecker products).
    ugh = jnp.asarray(_bilinear_matrix(Hs, Hg))                # (Hs, Hg)
    ugwT = jnp.asarray(_bilinear_matrix(Ws, Wg).T)             # (Wg, Ws)
    uh = jnp.asarray(_bilinear_matrix(H, Hs))                  # (H, Hs)
    uwT = jnp.asarray(_bilinear_matrix(W, Ws).T)               # (Ws, W)

    # ---- kernel 1: low-res attention map, tiled over rows of the sub-sampled image --
    bytes_per_row = Ws * (16 * C + 12 * Ci + 16)   # x_sub tile (dbl-buf) + f32 temps
    rt = _pick_row_tile(Hs, Ws, bytes_per_row, vmem_limit // 2)
    Trow = rt * Ws
    n_row = Hs // rt

    att_low = pl.pallas_call(
        _attention_kernel,
        out_shape=jax.ShapeDtypeStruct((B, 1, P), f32),
        grid=(B, n_row),
        in_specs=[
            pl.BlockSpec((None, 4 * C, Trow), lambda b, t: (b, 0, t)),
            pl.BlockSpec((None, Cg, Pg), lambda b, t: (b, 0, 0)),
            _full_spec((Ci, 4 * C)),
            _full_spec((Ci, Cg)),
            _full_spec((Ci, 1)),
            _full_spec((Ci, 1)),
            _full_spec((1, 1)),
            _full_spec((Hs, Hg)),
            _full_spec((Wg, Ws)),
        ],
        out_specs=pl.BlockSpec((None, 1, Trow), lambda b, t: (b, 0, t)),
        scratch_shapes=[pltpu.VMEM((Hg, Ci, Ws), f32)],
        compiler_params=cparams(("parallel", "arbitrary")),
    )(x_sub, g_cf, w_theta_bf, params["w_phi"], params["b_phi"],
      params["w_psi"], params["b_psi"], ugh, ugwT)

    # ---- kernel 1b: low->full separable bilinear upsample (f32 + bf16 copies) --------
    att_f32, att_b16 = pl.pallas_call(
        _upsample_kernel,
        out_shape=(jax.ShapeDtypeStruct((B, H, W), f32),
                   jax.ShapeDtypeStruct((B, H, W), bf16)),
        grid=(B,),
        in_specs=[
            pl.BlockSpec((None, Hs, Ws), lambda b: (b, 0, 0)),
            _full_spec((H, Hs)),
            _full_spec((Ws, W)),
        ],
        out_specs=(pl.BlockSpec((None, H, W), lambda b: (b, 0, 0)),
                   pl.BlockSpec((None, H, W), lambda b: (b, 0, 0))),
        compiler_params=cparams(("parallel",)),
    )(att_low.reshape(B, Hs, Ws), uh, uwT)

    # ---- lane-dense pixel tiling (generation-aware) for kernels 2 & 3 ----------------
    px_cap = max(128, min(8192, ((vmem_limit // 2) // (12 * C + 8)) // 128 * 128))
    Tpx, HWp = _choose_pixel_tile(HW, px_cap)
    nt = HWp // Tpx
    pad = HWp - HW

    att_flat = att_b16.reshape(B, 1, HW)
    if pad:
        # Zero-padded pixels contribute nothing to the moments and are sliced off.
        x_cf = jnp.pad(x_cf, ((0, 0), (0, 0), (0, pad)))
        att_flat = jnp.pad(att_flat, ((0, 0), (0, 0), (0, pad)))

    # ---- kernel 2: per-batch moments of y = att*x, accumulated in-kernel -------------
    sum_y, yyT = pl.pallas_call(
        _moments_kernel,
        out_shape=(jax.ShapeDtypeStruct((B, C, 1), f32),
                   jax.ShapeDtypeStruct((B, C, C), f32)),
        grid=(B, nt),
        in_specs=[
            pl.BlockSpec((None, C, Tpx), lambda b, t: (b, 0, t)),
            pl.BlockSpec((None, 1, Tpx), lambda b, t: (b, 0, t)),
        ],
        out_specs=(
            pl.BlockSpec((None, C, 1), lambda b, t: (b, 0, 0)),
            pl.BlockSpec((None, C, C), lambda b, t: (b, 0, 0)),
        ),
        compiler_params=cparams(("parallel", "arbitrary")),
    )(x_cf, att_flat)

    # ---- tiny O(C^2) glue: exact mean/covariance propagation through the linear
    # conv -> BN(train) -> conv -> BN(train) chain, collapsed to out = relu(A@y + d) ---
    # TODO(synk): cov_y = E[yyT] - mu mu^T can cancel for activations with mean >> std.
    n_pix = B * HW
    mu_y = jnp.sum(sum_y, axis=0) / n_pix                               # (C, 1)
    cov_y = jnp.sum(yyT, axis=0) / n_pix - mu_y @ mu_y.T                # (C, C)

    Ww, bw = params["w_W"], params["b_W"]
    gamma1, beta1 = params["gamma_W"], params["beta_W"]
    Wc, bc = params["w_comb"], params["b_comb"]
    gamma2, beta2 = params["gamma_comb"], params["beta_comb"]

    cov_w = Ww @ cov_y @ Ww.T                                           # cov of W@y+b
    mu_w = Ww @ mu_y + bw
    s1 = gamma1 * jax.lax.rsqrt(jnp.diagonal(cov_w)[:, None] + _EPS)    # BN1 scale
    cov_g1 = s1 * cov_w * s1.T                                          # cov of gate1
    mu_c = Wc @ beta1 + bc                                              # E[combine]
    var_c = jnp.diagonal(Wc @ cov_g1 @ Wc.T)[:, None]
    s2 = gamma2 * jax.lax.rsqrt(var_c + _EPS)                           # BN2 scale
    A = (s2 * Wc) @ (s1 * Ww)                                           # (C, C)
    d = s2 * (Wc @ (s1 * (bw - mu_w) + beta1) + bc - mu_c) + beta2      # (C, 1)
    A_bf = A.astype(bf16)                                               # hoisted cast

    # ---- kernel 3: apply the collapsed affine map + ReLU per pixel tile --------------
    out_cf = pl.pallas_call(
        _apply_kernel,
        out_shape=jax.ShapeDtypeStruct((B, C, HWp), f32),
        grid=(B, nt),
        in_specs=[
            pl.BlockSpec((None, C, Tpx), lambda b, t: (b, 0, t)),
            pl.BlockSpec((None, 1, Tpx), lambda b, t: (b, 0, t)),
            _full_spec((C, C)),
            _full_spec((C, 1)),
        ],
        out_specs=pl.BlockSpec((None, C, Tpx), lambda b, t: (b, 0, t)),
        compiler_params=cparams(("parallel", "parallel")),
    )(x_cf, att_flat, A_bf, d)

    out = out_cf[:, :, :HW].reshape(B, C, H, W)
    return out, att_f32.reshape(B, 1, H, W)


def init_params(key, in_size, gate_size, inter_size):
    ks = jax.random.split(key, 8)
    s = 0.1
    f32 = jnp.float32
    return {
        # theta: Conv2d(in -> inter, k=2, stride=2, bias=False); PyTorch (O, I, kH, kW)
        "w_theta": s * jax.random.normal(ks[0], (inter_size, in_size, 2, 2), f32),
        # phi: Conv2d(gate -> inter, k=1, bias=True)
        "w_phi": s * jax.random.normal(ks[1], (inter_size, gate_size), f32),
        "b_phi": s * jax.random.normal(ks[2], (inter_size, 1), f32),
        # psi: Conv2d(inter -> 1, k=1, bias=True)
        "w_psi": s * jax.random.normal(ks[3], (inter_size, 1), f32),
        "b_psi": s * jax.random.normal(ks[4], (1, 1), f32),
        # W: Conv2d(in -> in, k=1) + BatchNorm2d(in)  (BN default init)
        "w_W": s * jax.random.normal(ks[5], (in_size, in_size), f32),
        "b_W": jnp.zeros((in_size, 1), f32),
        "gamma_W": jnp.ones((in_size, 1), f32),
        "beta_W": jnp.zeros((in_size, 1), f32),
        # combine_gates: Conv2d(in -> in, k=1) + BatchNorm2d + ReLU
        "w_comb": s * jax.random.normal(ks[6], (in_size, in_size), f32),
        "b_comb": s * jax.random.normal(ks[7], (in_size, 1), f32),
        "gamma_comb": jnp.ones((in_size, 1), f32),
        "beta_comb": jnp.zeros((in_size, 1), f32),
    }


def _reference(x, g, p):
    """Dense pure-JAX forward used only as a sanity check."""
    f32 = jnp.float32
    B, C, H, W = x.shape
    _, Cg, Hg, Wg = g.shape
    Hs, Ws = H // 2, W // 2
    x = x.astype(f32)
    g = g.astype(f32)
    theta = jax.lax.conv_general_dilated(
        x, p["w_theta"], window_strides=(2, 2), padding="VALID",
        dimension_numbers=("NCHW", "OIHW", "NCHW"))
    phi = jnp.einsum("oc,bchw->bohw", p["w_phi"], g) + p["b_phi"].reshape(1, -1, 1, 1)
    ah = jnp.asarray(_bilinear_matrix(Hs, Hg))
    aw = jnp.asarray(_bilinear_matrix(Ws, Wg))
    phi_up = jnp.einsum("sh,tw,bchw->bcst", ah, aw, phi)
    f = jax.nn.relu(theta + phi_up)
    psi = jnp.einsum("co,bcst->bost", p["w_psi"], f) + p["b_psi"].reshape(1, 1, 1, 1)
    att_s = jax.nn.sigmoid(psi)
    bh = jnp.asarray(_bilinear_matrix(H, Hs))
    bw2 = jnp.asarray(_bilinear_matrix(W, Ws))
    att = jnp.einsum("is,jt,bxst->bxij", bh, bw2, att_s)
    y = att * x

    def bn(z, gamma, beta):
        mu = z.mean(axis=(0, 2, 3), keepdims=True)
        var = z.var(axis=(0, 2, 3), keepdims=True)
        return ((z - mu) * jax.lax.rsqrt(var + _EPS) * gamma.reshape(1, -1, 1, 1)
                + beta.reshape(1, -1, 1, 1))

    wy = jnp.einsum("oc,bchw->bohw", p["w_W"], y) + p["b_W"].reshape(1, -1, 1, 1)
    gate1 = bn(wy, p["gamma_W"], p["beta_W"])
    cg = jnp.einsum("oc,bchw->bohw", p["w_comb"], gate1) + p["b_comb"].reshape(1, -1, 1, 1)
    out = jax.nn.relu(bn(cg, p["gamma_comb"], p["beta_comb"]))
    return out, att


if __name__ == "__main__":
    B, C_in, C_gate, C_inter = 2, 4, 8, 4
    H = W = 16
    Hg = Wg = 4

    key = jax.random.PRNGKey(0)
    kx, kg, kp = jax.random.split(key, 3)
    x = jax.random.normal(kx, (B, C_in, H, W), jnp.float32)      # NCHW input
    g = jax.random.normal(kg, (B, C_gate, Hg, Wg), jnp.float32)  # NCHW gating signal
    params = init_params(kp, C_in, C_gate, C_inter)

    out, att = multi_attention_block(x, g, params)
    out = jax.block_until_ready(out)
    att = jax.block_until_ready(att)

    assert out.shape == (B, C_in, H, W) and att.shape == (B, 1, H, W)
    assert bool(jnp.all(jnp.isfinite(out))) and bool(jnp.all(jnp.isfinite(att)))

    # Sanity check against a dense pure-JAX reference (loose tolerance: bf16 storage +
    # bf16 MXU operands in the kernels).
    out_ref, att_ref = _reference(x, g, params)
    assert bool(jnp.allclose(att, att_ref, rtol=5e-2, atol=1e-2)), \
        float(jnp.max(jnp.abs(att - att_ref)))
    assert bool(jnp.allclose(out, out_ref, rtol=5e-2, atol=5e-2)), \
        float(jnp.max(jnp.abs(out - out_ref)))

    print("KERNEL_OK")
</pallas_src>

<mosaic_0001>
module attributes {stable_mosaic.version = 11 : i64} {
  func.func @_attention_kernel(%arg0: i32, %arg1: i32, %arg2: memref<1x16x64xbf16, #tpu.memory_space<vmem>>, %arg3: memref<1x8x16xf32, #tpu.memory_space<vmem>>, %arg4: memref<4x16xbf16, #tpu.memory_space<vmem>>, %arg5: memref<4x8xf32, #tpu.memory_space<vmem>>, %arg6: memref<4x1xf32, #tpu.memory_space<vmem>>, %arg7: memref<4x1xf32, #tpu.memory_space<vmem>>, %arg8: memref<1x1xf32, #tpu.memory_space<vmem>>, %arg9: memref<8x4xf32, #tpu.memory_space<vmem>>, %arg10: memref<4x8xf32, #tpu.memory_space<vmem>>, %arg11: memref<1x1x64xf32, #tpu.memory_space<vmem>>, %arg12: memref<4x4x8xf32, #tpu.memory_space<vmem>>) attributes {dimension_semantics = [#tpu.dimension_semantics<parallel>, #tpu.dimension_semantics<arbitrary>], iteration_bounds = array<i64: 2, 1>, scalar_prefetch = 0 : i64, scratch_operands = 1 : i64, tpu.core_type = #tpu.core_type<tc>, window_params = [{transform_indices = @transform_0, window_bounds = array<i64: 1, 16, 64>}, {transform_indices = @transform_1, window_bounds = array<i64: 1, 8, 16>}, {pipeline_mode = #tpu.pipeline_mode<synchronous>, transform_indices = @transform_2, window_bounds = array<i64: 4, 16>}, {pipeline_mode = #tpu.pipeline_mode<synchronous>, transform_indices = @transform_3, window_bounds = array<i64: 4, 8>}, {pipeline_mode = #tpu.pipeline_mode<synchronous>, transform_indices = @transform_4, window_bounds = array<i64: 4, 1>}, {pipeline_mode = #tpu.pipeline_mode<synchronous>, transform_indices = @transform_5, window_bounds = array<i64: 4, 1>}, {pipeline_mode = #tpu.pipeline_mode<synchronous>, transform_indices = @transform_6, window_bounds = array<i64: 1, 1>}, {pipeline_mode = #tpu.pipeline_mode<synchronous>, transform_indices = @transform_7, window_bounds = array<i64: 8, 4>}, {pipeline_mode = #tpu.pipeline_mode<synchronous>, transform_indices = @transform_8, window_bounds = array<i64: 4, 8>}, {transform_indices = @transform_9, window_bounds = array<i64: 1, 1, 64>}]} {
    %c0_i32 = arith.constant 0 : i32
    %0 = arith.cmpi eq, %arg1, %c0_i32 : i32
    %1 = arith.extui %0 : i1 to i32
    %c0_i32_0 = arith.constant 0 : i32
    %2 = arith.cmpi ne, %1, %c0_i32_0 : i32
    scf.if %2 {
      %c0_26 = arith.constant 0 : index
      %c0_27 = arith.constant 0 : index
      %67 = vector.load %arg5[%c0_26, %c0_27] : memref<4x8xf32, #tpu.memory_space<vmem>>, vector<4x8xf32>
      %c0_28 = arith.constant 0 : index
      %c0_29 = arith.constant 0 : index
      %c0_30 = arith.constant 0 : index
      %68 = vector.load %arg3[%c0_28, %c0_29, %c0_30] : memref<1x8x16xf32, #tpu.memory_space<vmem>>, vector<1x8x16xf32>
      %69 = vector.shape_cast %68 : vector<1x8x16xf32> to vector<8x16xf32>
      %cst_31 = arith.constant dense<0.000000e+00> : vector<4x16xf32>
      %70 = tpu.matmul %67, %69, %cst_31 {dimension_numbers = #tpu.dot_dimension_numbers<[1], [0], [0], [1], [0, 0, 1, 1], [], []>} : vector<4x8xf32>, vector<8x16xf32>, vector<4x16xf32> -> vector<4x16xf32>
      %c0_32 = arith.constant 0 : index
      %c0_33 = arith.constant 0 : index
      %71 = vector.load %arg6[%c0_32, %c0_33] : memref<4x1xf32, #tpu.memory_space<vmem>>, vector<4x1xf32>
      %72 = vector.broadcast %71 : vector<4x1xf32> to vector<4x16xf32>
      %73 = arith.addf %70, %72 : vector<4x16xf32>
      %74 = vector.extract_strided_slice %73 {offsets = [0, 0], sizes = [4, 4], strides = [1, 1]} : vector<4x16xf32> to vector<4x4xf32>
      %c0_34 = arith.constant 0 : index
      %c0_35 = arith.constant 0 : index
      %75 = vector.load %arg10[%c0_34, %c0_35] : memref<4x8xf32, #tpu.memory_space<vmem>>, vector<4x8xf32>
      %cst_36 = arith.constant dense<0.000000e+00> : vector<4x8xf32>
      %76 = tpu.matmul %74, %75, %cst_36 {dimension_numbers = #tpu.dot_dimension_numbers<[1], [0], [0], [1], [0, 0, 1, 1], [], []>} : vector<4x4xf32>, vector<4x8xf32>, vector<4x8xf32> -> vector<4x8xf32>
      %c0_37 = arith.constant 0 : index
      %c0_38 = arith.constant 0 : index
      %c0_39 = arith.constant 0 : index
      %77 = vector.load %arg12[%c0_37, %c0_38, %c0_39] : memref<4x4x8xf32, #tpu.memory_space<vmem>>, vector<1x4x8xf32>
      %78 = vector.shape_cast %77 : vector<1x4x8xf32> to vector<4x8xf32>
      %79 = vector.shape_cast %76 : vector<4x8xf32> to vector<1x4x8xf32>
      tpu.vector_store %arg12[%c0_37, %c0_38, %c0_39], %79 {strides = array<i32>} : memref<4x4x8xf32, #tpu.memory_space<vmem>>, vector<1x4x8xf32>,
      %80 = vector.extract_strided_slice %73 {offsets = [0, 4], sizes = [4, 4], strides = [1, 1]} : vector<4x16xf32> to vector<4x4xf32>
      %c0_40 = arith.constant 0 : index
      %c0_41 = arith.constant 0 : index
      %81 = vector.load %arg10[%c0_40, %c0_41] : memref<4x8xf32, #tpu.memory_space<vmem>>, vector<4x8xf32>
      %cst_42 = arith.constant dense<0.000000e+00> : vector<4x8xf32>
      %82 = tpu.matmul %80, %81, %cst_42 {dimension_numbers = #tpu.dot_dimension_numbers<[1], [0], [0], [1], [0, 0, 1, 1], [], []>} : vector<4x4xf32>, vector<4x8xf32>, vector<4x8xf32> -> vector<4x8xf32>
      %c1_43 = arith.constant 1 : index
      %c0_44 = arith.constant 0 : index
      %c0_45 = arith.constant 0 : index
      %83 = vector.load %arg12[%c1_43, %c0_44, %c0_45] : memref<4x4x8xf32, #tpu.memory_space<vmem>>, vector<1x4x8xf32>
      %84 = vector.shape_cast %83 : vector<1x4x8xf32> to vector<4x8xf32>
      %85 = vector.shape_cast %82 : vector<4x8xf32> to vector<1x4x8xf32>
      tpu.vector_store %arg12[%c1_43, %c0_44, %c0_45], %85 {strides = array<i32>} : memref<4x4x8xf32, #tpu.memory_space<vmem>>, vector<1x4x8xf32>,
      %86 = vector.extract_strided_slice %73 {offsets = [0, 8], sizes = [4, 4], strides = [1, 1]} : vector<4x16xf32> to vector<4x4xf32>
      %c0_46 = arith.constant 0 : index
      %c0_47 = arith.constant 0 : index
      %87 = vector.load %arg10[%c0_46, %c0_47] : memref<4x8xf32, #tpu.memory_space<vmem>>, vector<4x8xf32>
      %cst_48 = arith.constant dense<0.000000e+00> : vector<4x8xf32>
      %88 = tpu.matmul %86, %87, %cst_48 {dimension_numbers = #tpu.dot_dimension_numbers<[1], [0], [0], [1], [0, 0, 1, 1], [], []>} : vector<4x4xf32>, vector<4x8xf32>, vector<4x8xf32> -> vector<4x8xf32>
      %c2_49 = arith.constant 2 : index
      %c0_50 = arith.constant 0 : index
      %c0_51 = arith.constant 0 : index
      %89 = vector.load %arg12[%c2_49, %c0_50, %c0_51] : memref<4x4x8xf32, #tpu.memory_space<vmem>>, vector<1x4x8xf32>
      %90 = vector.shape_cast %89 : vector<1x4x8xf32> to vector<4x8xf32>
      %91 = vector.shape_cast %88 : vector<4x8xf32> to vector<1x4x8xf32>
      tpu.vector_store %arg12[%c2_49, %c0_50, %c0_51], %91 {strides = array<i32>} : memref<4x4x8xf32, #tpu.memory_space<vmem>>, vector<1x4x8xf32>,
      %92 = vector.extract_strided_slice %73 {offsets = [0, 12], sizes = [4, 4], strides = [1, 1]} : vector<4x16xf32> to vector<4x4xf32>
      %c0_52 = arith.constant 0 : index
      %c0_53 = arith.constant 0 : index
      %93 = vector.load %arg10[%c0_52, %c0_53] : memref<4x8xf32, #tpu.memory_space<vmem>>, vector<4x8xf32>
      %cst_54 = arith.constant dense<0.000000e+00> : vector<4x8xf32>
      %94 = tpu.matmul %92, %93, %cst_54 {dimension_numbers = #tpu.dot_dimension_numbers<[1], [0], [0], [1], [0, 0, 1, 1], [], []>} : vector<4x4xf32>, vector<4x8xf32>, vector<4x8xf32> -> vector<4x8xf32>
      %c3_55 = arith.constant 3 : index
      %c0_56 = arith.constant 0 : index
      %c0_57 = arith.constant 0 : index
      %95 = vector.load %arg12[%c3_55, %c0_56, %c0_57] : memref<4x4x8xf32, #tpu.memory_space<vmem>>, vector<1x4x8xf32>
      %96 = vector.shape_cast %95 : vector<1x4x8xf32> to vector<4x8xf32>
      %97 = vector.shape_cast %94 : vector<4x8xf32> to vector<1x4x8xf32>
      tpu.vector_store %arg12[%c3_55, %c0_56, %c0_57], %97 {strides = array<i32>} : memref<4x4x8xf32, #tpu.memory_space<vmem>>, vector<1x4x8xf32>,
    } else {
    }
    %c0 = arith.constant 0 : index
    %c0_1 = arith.constant 0 : index
    %3 = vector.load %arg4[%c0, %c0_1] : memref<4x16xbf16, #tpu.memory_space<vmem>>, vector<4x16xbf16>
    %c0_2 = arith.constant 0 : index
    %c0_3 = arith.constant 0 : index
    %c0_4 = arith.constant 0 : index
    %4 = vector.load %arg2[%c0_2, %c0_3, %c0_4] : memref<1x16x64xbf16, #tpu.memory_space<vmem>>, vector<1x16x64xbf16>
    %5 = vector.shape_cast %4 : vector<1x16x64xbf16> to vector<16x64xbf16>
    %cst = arith.constant dense<0.000000e+00> : vector<4x64xf32>
    %6 = tpu.matmul %3, %5, %cst {dimension_numbers = #tpu.dot_dimension_numbers<[1], [0], [0], [1], [0, 0, 1, 1], [], []>} : vector<4x16xbf16>, vector<16x64xbf16>, vector<4x64xf32> -> vector<4x64xf32>
    %c8_i32 = arith.constant 8 : i32
    %7 = arith.muli %arg1, %c8_i32 : i32
    %8 = arith.index_cast %7 : i32 to index
    %c0_5 = arith.constant 0 : index
    %9 = vector.load %arg9[%8, %c0_5] : memref<8x4xf32, #tpu.memory_space<vmem>>, vector<8x4xf32>
    %cst_6 = arith.constant 0.000000e+00 : f32
    %10 = vector.broadcast %cst_6 : f32 to vector<4x8x8xf32>
    %11 = vector.extract_strided_slice %9 {offsets = [0, 0], sizes = [8, 1], strides = [1, 1]} : vector<8x4xf32> to vector<8x1xf32>
    %12 = vector.shape_cast %11 : vector<8x1xf32> to vector<1x8x1xf32>
    %c0_7 = arith.constant 0 : index
    %c0_8 = arith.constant 0 : index
    %c0_9 = arith.constant 0 : index
    %13 = vector.load %arg12[%c0_7, %c0_8, %c0_9] : memref<4x4x8xf32, #tpu.memory_space<vmem>>, vector<1x4x8xf32>
    %14 = vector.shape_cast %13 : vector<1x4x8xf32> to vector<4x8xf32>
    %15 = vector.shape_cast %14 : vector<4x8xf32> to vector<4x1x8xf32>
    %16 = vector.broadcast %12 : vector<1x8x1xf32> to vector<4x8x8xf32>
    %17 = vector.broadcast %15 : vector<4x1x8xf32> to vector<4x8x8xf32>
    %18 = arith.mulf %16, %17 : vector<4x8x8xf32>
    %19 = arith.addf %10, %18 : vector<4x8x8xf32>
    %20 = vector.extract_strided_slice %9 {offsets = [0, 1], sizes = [8, 1], strides = [1, 1]} : vector<8x4xf32> to vector<8x1xf32>
    %21 = vector.shape_cast %20 : vector<8x1xf32> to vector<1x8x1xf32>
    %c1 = arith.constant 1 : index
    %c0_10 = arith.constant 0 : index
    %c0_11 = arith.constant 0 : index
    %22 = vector.load %arg12[%c1, %c0_10, %c0_11] : memref<4x4x8xf32, #tpu.memory_space<vmem>>, vector<1x4x8xf32>
    %23 = vector.shape_cast %22 : vector<1x4x8xf32> to vector<4x8xf32>
    %24 = vector.shape_cast %23 : vector<4x8xf32> to vector<4x1x8xf32>
    %25 = vector.broadcast %21 : vector<1x8x1xf32> to vector<4x8x8xf32>
    %26 = vector.broadcast %24 : vector<4x1x8xf32> to vector<4x8x8xf32>
    %27 = arith.mulf %25, %26 : vector<4x8x8xf32>
    %28 = arith.addf %19, %27 : vector<4x8x8xf32>
    %29 = vector.extract_strided_slice %9 {offsets = [0, 2], sizes = [8, 1], strides = [1, 1]} : vector<8x4xf32> to vector<8x1xf32>
    %30 = vector.shape_cast %29 : vector<8x1xf32> to vector<1x8x1xf32>
    %c2 = arith.constant 2 : index
    %c0_12 = arith.constant 0 : index
    %c0_13 = arith.constant 0 : index
    %31 = vector.load %arg12[%c2, %c0_12, %c0_13] : memref<4x4x8xf32, #tpu.memory_space<vmem>>, vector<1x4x8xf32>
    %32 = vector.shape_cast %31 : vector<1x4x8xf32> to vector<4x8xf32>
    %33 = vector.shape_cast %32 : vector<4x8xf32> to vector<4x1x8xf32>
    %34 = vector.broadcast %30 : vector<1x8x1xf32> to vector<4x8x8xf32>
    %35 = vector.broadcast %33 : vector<4x1x8xf32> to vector<4x8x8xf32>
    %36 = arith.mulf %34, %35 : vector<4x8x8xf32>
    %37 = arith.addf %28, %36 : vector<4x8x8xf32>
    %38 = vector.extract_strided_slice %9 {offsets = [0, 3], sizes = [8, 1], strides = [1, 1]} : vector<8x4xf32> to vector<8x1xf32>
    %39 = vector.shape_cast %38 : vector<8x1xf32> to vector<1x8x1xf32>
    %c3 = arith.constant 3 : index
    %c0_14 = arith.constant 0 : index
    %c0_15 = arith.constant 0 : index
    %40 = vector.load %arg12[%c3, %c0_14, %c0_15] : memref<4x4x8xf32, #tpu.memory_space<vmem>>, vector<1x4x8xf32>
    %41 = vector.shape_cast %40 : vector<1x4x8xf32> to vector<4x8xf32>
    %42 = vector.shape_cast %41 : vector<4x8xf32> to vector<4x1x8xf32>
    %43 = vector.broadcast %39 : vector<1x8x1xf32> to vector<4x8x8xf32>
    %44 = vector.broadcast %42 : vector<4x1x8xf32> to vector<4x8x8xf32>
    %45 = arith.mulf %43, %44 : vector<4x8x8xf32>
    %46 = arith.addf %37, %45 : vector<4x8x8xf32>
    %47 = vector.shape_cast %46 : vector<4x8x8xf32> to vector<4x64xf32>
    %48 = arith.addf %6, %47 : vector<4x64xf32>
    %cst_16 = arith.constant 0.000000e+00 : f32
    %49 = vector.broadcast %cst_16 : f32 to vector<4x64xf32>
    %50 = arith.maximumf %48, %49 : vector<4x64xf32>
    %c0_17 = arith.constant 0 : index
    %c0_18 = arith.constant 0 : index
    %51 = vector.load %arg7[%c0_17, %c0_18] : memref<4x1xf32, #tpu.memory_space<vmem>>, vector<4x1xf32>
    %52 = vector.broadcast %51 : vector<4x1xf32> to vector<4x64xf32>
    %53 = arith.mulf %52, %50 : vector<4x64xf32>
    %cst_19 = arith.constant dense<0.000000e+00> : vector<64xf32>
    %54 = vector.multi_reduction <add>, %53, %cst_19 [0] : vector<4x64xf32> to vector<64xf32>
    %55 = vector.shape_cast %54 : vector<64xf32> to vector<1x64xf32>
    %c0_20 = arith.constant 0 : index
    %c0_21 = arith.constant 0 : index
    %56 = vector.load %arg8[%c0_20, %c0_21] : memref<1x1xf32, #tpu.memory_space<vmem>>, vector<1x1xf32>
    %57 = vector.broadcast %56 : vector<1x1xf32> to vector<1x64xf32>
    %58 = arith.addf %55, %57 : vector<1x64xf32>
    %59 = arith.negf %58 : vector<1x64xf32>
    %60 = math.exp %59 : vector<1x64xf32>
    %cst_22 = arith.constant 1.000000e+00 : f32
    %61 = vector.broadcast %cst_22 : f32 to vector<1x64xf32>
    %62 = arith.addf %61, %60 : vector<1x64xf32>
    %63 = arith.divf %61, %62 : vector<1x64xf32>
    %c0_23 = arith.constant 0 : index
    %c0_24 = arith.constant 0 : index
    %c0_25 = arith.constant 0 : index
    %64 = vector.load %arg11[%c0_23, %c0_24, %c0_25] : memref<1x1x64xf32, #tpu.memory_space<vmem>>, vector<1x1x64xf32>
    %65 = vector.shape_cast %64 : vector<1x1x64xf32> to vector<1x64xf32>
    %66 = vector.shape_cast %63 : vector<1x64xf32> to vector<1x1x64xf32>
    tpu.vector_store %arg11[%c0_23, %c0_24, %c0_25], %66 {strides = array<i32>} : memref<1x1x64xf32, #tpu.memory_space<vmem>>, vector<1x1x64xf32>,
    return
  }
  func.func @transform_0(%arg0: i32, %arg1: i32) -> (i32, i32, i32) {
    %c0_i32 = arith.constant 0 : i32
    %c0_i32_0 = arith.constant 0 : i32
    return %arg0, %c0_i32, %arg1 : i32, i32, i32
  }
  func.func @transform_1(%arg0: i32, %arg1: i32) -> (i32, i32, i32) {
    %c0_i32 = arith.constant 0 : i32
    %c0_i32_0 = arith.constant 0 : i32
    %c0_i32_1 = arith.constant 0 : i32
    return %arg0, %c0_i32, %c0_i32_0 : i32, i32, i32
  }
  func.func @transform_2(%arg0: i32, %arg1: i32) -> (i32, i32) {
    %c0_i32 = arith.constant 0 : i32
    %c0_i32_0 = arith.constant 0 : i32
    %c0_i32_1 = arith.constant 0 : i32
    return %c0_i32, %c0_i32_0 : i32, i32
  }
  func.func @transform_3(%arg0: i32, %arg1: i32) -> (i32, i32) {
    %c0_i32 = arith.constant 0 : i32
    %c0_i32_0 = arith.constant 0 : i32
    %c0_i32_1 = arith.constant 0 : i32
    return %c0_i32, %c0_i32_0 : i32, i32
  }
  func.func @transform_4(%arg0: i32, %arg1: i32) -> (i32, i32) {
    %c0_i32 = arith.constant 0 : i32
    %c0_i32_0 = arith.constant 0 : i32
    %c0_i32_1 = arith.constant 0 : i32
    return %c0_i32, %c0_i32_0 : i32, i32
  }
  func.func @transform_5(%arg0: i32, %arg1: i32) -> (i32, i32) {
    %c0_i32 = arith.constant 0 : i32
    %c0_i32_0 = arith.constant 0 : i32
    %c0_i32_1 = arith.constant 0 : i32
    return %c0_i32, %c0_i32_0 : i32, i32
  }
  func.func @transform_6(%arg0: i32, %arg1: i32) -> (i32, i32) {
    %c0_i32 = arith.constant 0 : i32
    %c0_i32_0 = arith.constant 0 : i32
    %c0_i32_1 = arith.constant 0 : i32
    return %c0_i32, %c0_i32_0 : i32, i32
  }
  func.func @transform_7(%arg0: i32, %arg1: i32) -> (i32, i32) {
    %c0_i32 = arith.constant 0 : i32
    %c0_i32_0 = arith.constant 0 : i32
    %c0_i32_1 = arith.constant 0 : i32
    return %c0_i32, %c0_i32_0 : i32, i32
  }
  func.func @transform_8(%arg0: i32, %arg1: i32) -> (i32, i32) {
    %c0_i32 = arith.constant 0 : i32
    %c0_i32_0 = arith.constant 0 : i32
    %c0_i32_1 = arith.constant 0 : i32
    return %c0_i32, %c0_i32_0 : i32, i32
  }
  func.func @transform_9(%arg0: i32, %arg1: i32) -> (i32, i32, i32) {
    %c0_i32 = arith.constant 0 : i32
    %c0_i32_0 = arith.constant 0 : i32
    return %arg0, %c0_i32, %arg1 : i32, i32, i32
  }
}

</mosaic_0001>

<llo_original>
// kernel: tpu_custom_call.1
$region0: #{tpu_custom_call.1}
  #allocation0 [shape = 'u32[]', space=smem, size = 0x4, offset = 0x4, fixed_abs, tag = 'smem constant byte address 0x4 - core index']
  #allocation1 [shape = 'u32[144,128]{1,0:T(1,128)}', space=vmem, size = 0x12000, scoped, tag = 'internal scratch']
  #allocation2 [shape = 'f32[4,4,8]{2,1,0:T(4,128)}', space=vmem, size = 0x2000, scoped, tag = 'scratch operand']
  #allocation3 [shape = 'f32[1,1]{1,0:T(1,128)S(1)}', space=vmem, size = 0x200, scoped, tag = 'scoped memory for tpu_custom_call.1']
  %s0 = inlined_call_operand.vmem [shape: bf16[2,16,64], index: 0, kind: input, shape index: {}]
  %s1 = inlined_call_operand.hbm [shape: f32[2,8,16], index: 1, kind: input, shape index: {}]
  %s2 = inlined_call_operand.vmem [shape: bf16[4,16], index: 2, kind: input, shape index: {}]
  %s3 = inlined_call_operand.vmem [shape: f32[4,8], index: 3, kind: input, shape index: {}]
  %s4 = inlined_call_operand.vmem [shape: f32[4,1], index: 4, kind: input, shape index: {}]
  %s5 = inlined_call_operand.vmem [shape: f32[4,1], index: 5, kind: input, shape index: {}]
  %s6 = inlined_call_operand.<no memory space> [shape: f32[1,1], index: 6, kind: input, shape index: {}]
  %s7 = inlined_call_operand.vmem [shape: f32[8,4], index: 7, kind: input, shape index: {}]
  %s8 = inlined_call_operand.vmem [shape: f32[4,8], index: 8, kind: input, shape index: {}]
  %s9 = inlined_call_operand.hbm [shape: f32[2,1,64], index: 9, kind: output, shape index: {}]
  %s10 = sld [smem:[#allocation0]]
  $region77: #{tpu_custom_call.1} parent=0
    _
  %s12 = ssub.s32 1, %s10
  %s13 = scalar_select 0, %s12, %s10
  %v14 = vstv %s6
  %15 = vst [vmem:[#allocation3] sm:$0x1] %v14
  $region1: #{tpu_custom_call.1} parent=0
    #allocation4 [shape = 'u8[8192]{0}', space=vmem, size = 0x2000, scoped, tag = 'input window, operand 1']
    #allocation5 [shape = 's32[2]{0}', space=sflag, size = 0x8, scoped, tag = 'scoped memory for tpu_custom_call.1']
    #allocation6 [shape = 's32[2]{0}', space=sflag, size = 0x8, scoped, tag = 'scoped memory for tpu_custom_call.1']
    #allocation7 [shape = 'u8[1024]{0}', space=vmem, size = 0x400, scoped, tag = 'output window, operand 0']
    %16 = vsyncpa [#allocation5], 0
    %s17 = scalar_lea.sflag [#allocation5], 1
    %18 = vsyncpa %s17, 0
    %19 = vsyncpa [#allocation6], 0
    %s20 = scalar_lea.sflag [#allocation6], 1
    %21 = vsyncpa %s20, 0
    loop: start=0, step=1, limit=4
    $region2: #{tpu_custom_call.1} parent=1 // loop_pre_header
      _
    $region3: #{tpu_custom_call.1} parent=1 // loop_header
      %s23 = sphi 0, %s27
      %p24 = scmp.ge.s32.totalorder %s23, 4
      %s30 = sphi 0, %s42
      %s31 = sphi 0, %s38
      %s32 = sphi 0, %s30
      %s33 = sphi 0, %s31
      %s34 = sphi 0, %s32
      %s35 = sphi 0, %s33
      %s47 = sphi 0, %s49
      %s50 = sphi 0, %s47
      %s51 = sphi 0, %s50
      %s67 = sphi 0, %s51
      %s73 = sphi 0, %s75
      %s76 = sphi 0, %s73
      %s77 = sphi 0, %s76
      %s93 = sphi 0, %s77
      %s97 = sphi 0, %s97
      %s99 = sphi 0, %s97
      %s100 = sphi 0, %s99
      %s114 = sphi 0, %s100
      %s118 = sphi 0, %s118
      %s120 = sphi 0, %s118
      %s121 = sphi 0, %s120
      %s135 = sphi 0, %s121
      %s139 = sphi 0, %s139
      %s141 = sphi 0, %s139
      %s142 = sphi 0, %s141
      %s156 = sphi 0, %s142
      %s160 = sphi 0, %s160
      %s162 = sphi 0, %s160
      %s163 = sphi 0, %s162
      %s177 = sphi 0, %s163
      %s181 = sphi 0, %s181
      %s183 = sphi 0, %s181
      %s184 = sphi 0, %s183
      %s198 = sphi 0, %s184
      %s202 = sphi 0, %s202
      %s204 = sphi 0, %s202
      %s205 = sphi 0, %s204
      %s219 = sphi 0, %s205
      %s223 = sphi 0, %s223
      %s225 = sphi 0, %s223
      %s226 = sphi 0, %s225
      %s240 = sphi 0, %s226
      %s248 = sphi 0, %s250
      %s251 = sphi 0, %s248
      %s252 = sphi 0, %s251
      %s268 = sphi 0, %s252
    $region4: #{tpu_custom_call.1} parent=1 // loop_header_branch
      %26 = sbr.rel (%p24) target = $region8
    $region5: #{tpu_custom_call.1} parent=1 // loop_body
      %s28 = ssub.s32 %s23, 1
      %s29 = ssub.s32 %s23, 2
      %s36 = sadd.s32 1, %s31
      %p37 = scmp.ge.s32.totalorder %s36, 1
      %s38 = scalar_select %p37, 0, %s36
      %s39 = sadd.s32 1, %s30
      %s40 = scalar_select %p37, %s39, %s30
      %p41 = scmp.ge.s32.totalorder %s40, 2
      %s42 = scalar_select %p41, 0, %s40
      %s43 = ssub.s32 %s30, %s42
      %s44 = ssub.s32 %s31, %s38
      %s45 = sor.u32 %s43, %s44
      %p46 = scmp.eq.s32.totalorder %s45, 0
      %s48 = sadd.s32 %s47, 1
      %s49 = scalar_select %p46, %s47, %s48
      %p52 = pneg %p46
      %p53 = scmp.eq.s32.totalorder %s23, 1
      %p54 = por %p52, %p53
      %p55 = scmp.ne.s32.totalorder %s47, %s50
      %p56 = scmp.eq.s32.totalorder %s23, 0
      %p57 = por %p55, %p56
      %p58 = scmp.ne.s32.totalorder %s47, %s50
      %p59 = scmp.eq.s32.totalorder %s28, 1
      %p60 = por %p58, %p59
      %p61 = scmp.ne.s32.totalorder %s50, %s51
      %p62 = scmp.eq.s32.totalorder %s28, 0
      %p63 = por %p61, %p62
      %p64 = scmp.ne.s32.totalorder %s50, %s51
      %p65 = scmp.eq.s32.totalorder %s29, 1
      %p66 = por %p64, %p65
      %p68 = scmp.ne.s32.totalorder %s51, %s67
      %p69 = scmp.eq.s32.totalorder %s29, 0
      %p70 = por %p68, %p69
      %s71 = ssub.s32 %s30, %s42
      %p72 = scmp.eq.s32.totalorder %s71, 0
      %s74 = sadd.s32 %s73, 1
      %s75 = scalar_select %p72, %s73, %s74
      %p78 = pneg %p72
      %p79 = scmp.eq.s32.totalorder %s23, 1
      %p80 = por %p78, %p79
      %p81 = scmp.ne.s32.totalorder %s73, %s76
      %p82 = scmp.eq.s32.totalorder %s23, 0
      %p83 = por %p81, %p82
      %p84 = scmp.ne.s32.totalorder %s73, %s76
      %p85 = scmp.eq.s32.totalorder %s28, 1
      %p86 = por %p84, %p85
      %p87 = scmp.ne.s32.totalorder %s76, %s77
      %p88 = scmp.eq.s32.totalorder %s28, 0
      %p89 = por %p87, %p88
      %p90 = scmp.ne.s32.totalorder %s76, %s77
      %p91 = scmp.eq.s32.totalorder %s29, 1
      %p92 = por %p90, %p91
      %p94 = scmp.ne.s32.totalorder %s77, %s93
      %p95 = scmp.eq.s32.totalorder %s29, 0
      %p96 = por %p94, %p95
      %s98 = sadd.s32 %s97, 1
      %p101 = scmp.eq.s32.totalorder %s23, 1
      %p102 = scmp.ne.s32.totalorder %s97, %s99
      %p103 = scmp.eq.s32.totalorder %s23, 0
      %p104 = por %p102, %p103
      %p105 = scmp.ne.s32.totalorder %s97, %s99
      %p106 = scmp.eq.s32.totalorder %s28, 1
      %p107 = por %p105, %p106
      %p108 = scmp.ne.s32.totalorder %s99, %s100
      %p109 = scmp.eq.s32.totalorder %s28, 0
      %p110 = por %p108, %p109
      %p111 = scmp.ne.s32.totalorder %s99, %s100
      %p112 = scmp.eq.s32.totalorder %s29, 1
      %p113 = por %p111, %p112
      %p115 = scmp.ne.s32.totalorder %s100, %s114
      %p116 = scmp.eq.s32.totalorder %s29, 0
      %p117 = por %p115, %p116
      %s119 = sadd.s32 %s118, 1
      %p122 = scmp.eq.s32.totalorder %s23, 1
      %p123 = scmp.ne.s32.totalorder %s118, %s120
      %p124 = scmp.eq.s32.totalorder %s23, 0
      %p125 = por %p123, %p124
      %p126 = scmp.ne.s32.totalorder %s118, %s120
      %p127 = scmp.eq.s32.totalorder %s28, 1
      %p128 = por %p126, %p127
      %p129 = scmp.ne.s32.totalorder %s120, %s121
      %p130 = scmp.eq.s32.totalorder %s28, 0
      %p131 = por %p129, %p130
      %p132 = scmp.ne.s32.totalorder %s120, %s121
      %p133 = scmp.eq.s32.totalorder %s29, 1
      %p134 = por %p132, %p133
      %p136 = scmp.ne.s32.totalorder %s121, %s135
      %p137 = scmp.eq.s32.totalorder %s29, 0
      %p138 = por %p136, %p137
      %s140 = sadd.s32 %s139, 1
      %p143 = scmp.eq.s32.totalorder %s23, 1
      %p144 = scmp.ne.s32.totalorder %s139, %s141
      %p145 = scmp.eq.s32.totalorder %s23, 0
      %p146 = por %p144, %p145
      %p147 = scmp.ne.s32.totalorder %s139, %s141
      %p148 = scmp.eq.s32.totalorder %s28, 1
      %p149 = por %p147, %p148
      %p150 = scmp.ne.s32.totalorder %s141, %s142
      %p151 = scmp.eq.s32.totalorder %s28, 0
      %p152 = por %p150, %p151
      %p153 = scmp.ne.s32.totalorder %s141, %s142
      %p154 = scmp.eq.s32.totalorder %s29, 1
      %p155 = por %p153, %p154
      %p157 = scmp.ne.s32.totalorder %s142, %s156
      %p158 = scmp.eq.s32.totalorder %s29, 0
      %p159 = por %p157, %p158
      %s161 = sadd.s32 %s160, 1
      %p164 = scmp.eq.s32.totalorder %s23, 1
      %p165 = scmp.ne.s32.totalorder %s160, %s162
      %p166 = scmp.eq.s32.totalorder %s23, 0
      %p167 = por %p165, %p166
      %p168 = scmp.ne.s32.totalorder %s160, %s162
      %p169 = scmp.eq.s32.totalorder %s28, 1
      %p170 = por %p168, %p169
      %p171 = scmp.ne.s32.totalorder %s162, %s163
      %p172 = scmp.eq.s32.totalorder %s28, 0
      %p173 = por %p171, %p172
      %p174 = scmp.ne.s32.totalorder %s162, %s163
      %p175 = scmp.eq.s32.totalorder %s29, 1
      %p176 = por %p174, %p175
      %p178 = scmp.ne.s32.totalorder %s163, %s177
      %p179 = scmp.eq.s32.totalorder %s29, 0
      %p180 = por %p178, %p179
      %s182 = sadd.s32 %s181, 1
      %p185 = scmp.eq.s32.totalorder %s23, 1
      %p186 = scmp.ne.s32.totalorder %s181, %s183
      %p187 = scmp.eq.s32.totalorder %s23, 0
      %p188 = por %p186, %p187
      %p189 = scmp.ne.s32.totalorder %s181, %s183
      %p190 = scmp.eq.s32.totalorder %s28, 1
      %p191 = por %p189, %p190
      %p192 = scmp.ne.s32.totalorder %s183, %s184
      %p193 = scmp.eq.s32.totalorder %s28, 0
      %p194 = por %p192, %p193
      %p195 = scmp.ne.s32.totalorder %s183, %s184
      %p196 = scmp.eq.s32.totalorder %s29, 1
      %p197 = por %p195, %p196
      %p199 = scmp.ne.s32.totalorder %s184, %s198
      %p200 = scmp.eq.s32.totalorder %s29, 0
      %p201 = por %p199, %p200
      %s203 = sadd.s32 %s202, 1
      %p206 = scmp.eq.s32.totalorder %s23, 1
      %p207 = scmp.ne.s32.totalorder %s202, %s204
      %p208 = scmp.eq.s32.totalorder %s23, 0
      %p209 = por %p207, %p208
      %p210 = scmp.ne.s32.totalorder %s202, %s204
      %p211 = scmp.eq.s32.totalorder %s28, 1
      %p212 = por %p210, %p211
      %p213 = scmp.ne.s32.totalorder %s204, %s205
      %p214 = scmp.eq.s32.totalorder %s28, 0
      %p215 = por %p213, %p214
      %p216 = scmp.ne.s32.totalorder %s204, %s205
      %p217 = scmp.eq.s32.totalorder %s29, 1
      %p218 = por %p216, %p217
      %p220 = scmp.ne.s32.totalorder %s205, %s219
      %p221 = scmp.eq.s32.totalorder %s29, 0
      %p222 = por %p220, %p221
      %s224 = sadd.s32 %s223, 1
      %p227 = scmp.eq.s32.totalorder %s23, 1
      %p228 = scmp.ne.s32.totalorder %s223, %s225
      %p229 = scmp.eq.s32.totalorder %s23, 0
      %p230 = por %p228, %p229
      %p231 = scmp.ne.s32.totalorder %s223, %s225
      %p232 = scmp.eq.s32.totalorder %s28, 1
      %p233 = por %p231, %p232
      %p234 = scmp.ne.s32.totalorder %s225, %s226
      %p235 = scmp.eq.s32.totalorder %s28, 0
      %p236 = por %p234, %p235
      %p237 = scmp.ne.s32.totalorder %s225, %s226
      %p238 = scmp.eq.s32.totalorder %s29, 1
      %p239 = por %p237, %p238
      %p241 = scmp.ne.s32.totalorder %s226, %s240
      %p242 = scmp.eq.s32.totalorder %s29, 0
      %p243 = por %p241, %p242
      %s244 = ssub.s32 %s30, %s42
      %s245 = ssub.s32 %s31, %s38
      %s246 = sor.u32 %s244, %s245
      %p247 = scmp.eq.s32.totalorder %s246, 0
      %s249 = sadd.s32 %s248, 1
      %s250 = scalar_select %p247, %s248, %s249
      %p253 = pneg %p247
      %p254 = scmp.eq.s32.totalorder %s23, 1
      %p255 = por %p253, %p254
      %p256 = scmp.ne.s32.totalorder %s248, %s251
      %p257 = scmp.eq.s32.totalorder %s23, 0
      %p258 = por %p256, %p257
      %p259 = scmp.ne.s32.totalorder %s248, %s251
      %p260 = scmp.eq.s32.totalorder %s28, 1
      %p261 = por %p259, %p260
      %p262 = scmp.ne.s32.totalorder %s251, %s252
      %p263 = scmp.eq.s32.totalorder %s28, 0
      %p264 = por %p262, %p263
      %p265 = scmp.ne.s32.totalorder %s251, %s252
      %p266 = scmp.eq.s32.totalorder %s29, 1
      %p267 = por %p265, %p266
      %p269 = scmp.ne.s32.totalorder %s252, %s268
      %p270 = scmp.eq.s32.totalorder %s29, 0
      %p271 = por %p269, %p270
      %p272 = scmp.le.s32.totalorder 1, %s23
      %p273 = scmp.lt.s32.totalorder %s23, 3
      %p274 = pnand %p272, %p273
      %p275 = pneg %p274
      // Predicated region
      $region9: #{tpu_custom_call.1} parent=5 // pred_check
        _
      $region10: #{tpu_custom_call.1} parent=5 // pred_check_branch
        %277 = sbr.rel (%p274) target = $region12
      $region11: #{tpu_custom_call.1} parent=5 // pred_region
        %s278 = ssub.s32 %s23, 1
        // Predicated region
        $region13: #{tpu_custom_call.1} parent=11 // pred_check
          %p279 = pneg %p110
        $region14: #{tpu_custom_call.1} parent=11 // pred_check_branch
          %281 = sbr.rel (%p279) target = $region16
        $region15: #{tpu_custom_call.1} parent=11 // pred_region
          _
        $region16: #{tpu_custom_call.1} parent=11 // pred_fallthru
          _
        // Predicated region
        $region17: #{tpu_custom_call.1} parent=11 // pred_check
          %p282 = pneg %p131
        $region18: #{tpu_custom_call.1} parent=11 // pred_check_branch
          %284 = sbr.rel (%p282) target = $region20
        $region19: #{tpu_custom_call.1} parent=11 // pred_region
          _
        $region20: #{tpu_custom_call.1} parent=11 // pred_fallthru
          _
        // Predicated region
        $region21: #{tpu_custom_call.1} parent=11 // pred_check
          %p285 = pneg %p152
        $region22: #{tpu_custom_call.1} parent=11 // pred_check_branch
          %287 = sbr.rel (%p285) target = $region24
        $region23: #{tpu_custom_call.1} parent=11 // pred_region
          _
        $region24: #{tpu_custom_call.1} parent=11 // pred_fallthru
          _
        // Predicated region
        $region25: #{tpu_custom_call.1} parent=11 // pred_check
          %p288 = pneg %p173
        $region26: #{tpu_custom_call.1} parent=11 // pred_check_branch
          %290 = sbr.rel (%p288) target = $region28
        $region27: #{tpu_custom_call.1} parent=11 // pred_region
          _
        $region28: #{tpu_custom_call.1} parent=11 // pred_fallthru
          _
        // Predicated region
        $region29: #{tpu_custom_call.1} parent=11 // pred_check
          %p291 = pneg %p194
        $region30: #{tpu_custom_call.1} parent=11 // pred_check_branch
          %293 = sbr.rel (%p291) target = $region32
        $region31: #{tpu_custom_call.1} parent=11 // pred_region
          _
        $region32: #{tpu_custom_call.1} parent=11 // pred_fallthru
          _
        // Predicated region
        $region33: #{tpu_custom_call.1} parent=11 // pred_check
          %p294 = pneg %p215
        $region34: #{tpu_custom_call.1} parent=11 // pred_check_branch
          %296 = sbr.rel (%p294) target = $region36
        $region35: #{tpu_custom_call.1} parent=11 // pred_region
          _
        $region36: #{tpu_custom_call.1} parent=11 // pred_fallthru
          _
        // Predicated region
        $region37: #{tpu_custom_call.1} parent=11 // pred_check
          %p297 = pneg %p236
        $region38: #{tpu_custom_call.1} parent=11 // pred_check_branch
          %299 = sbr.rel (%p297) target = $region40
        $region39: #{tpu_custom_call.1} parent=11 // pred_region
          _
        $region40: #{tpu_custom_call.1} parent=11 // pred_fallthru
          _
      $region12: #{tpu_custom_call.1} parent=5 // pred_fallthru
        _
      %p300 = scmp.lt.s32.totalorder %s23, 2
      // Predicated region
      $region41: #{tpu_custom_call.1} parent=5 // pred_check
        %p301 = pneg %p300
      $region42: #{tpu_custom_call.1} parent=5 // pred_check_branch
        %303 = sbr.rel (%p301) target = $region44
      $region43: #{tpu_custom_call.1} parent=5 // pred_region
        // Predicated region
        $region45: #{tpu_custom_call.1} parent=43 // pred_check
          %p304 = pneg %p57
        $region46: #{tpu_custom_call.1} parent=43 // pred_check_branch
          %306 = sbr.rel (%p304) target = $region48
        $region47: #{tpu_custom_call.1} parent=43 // pred_region
          %p307 = scmp.lt.s32.totalorder %s30, 1
          %s308 = scalar_select %p307, %s30, 1
          %p309 = scmp.lt.s32.totalorder %s31, 0
          %s310 = scalar_select %p309, %s31, 0
          %s311 = smul.addr %s308, 2
          %s312 = sadd.s32 %s310, %s311
          %s313 = smul.addr %s312, 4
          %s314 = scalar_lea.vmem %s0, %s313
        $region48: #{tpu_custom_call.1} parent=43 // pred_fallthru
          _
        // Predicated region
        $region49: #{tpu_custom_call.1} parent=43 // pred_check
          %p315 = pneg %p83
        $region50: #{tpu_custom_call.1} parent=43 // pred_check_branch
          %317 = sbr.rel (%p315) target = $region52
        $region51: #{tpu_custom_call.1} parent=43 // pred_region
          %s318 = sand.u32 %s73, 1
          %s319 = scalar_lea.sflag [#allocation5], %s318
          %s320 = sand.u32 %s73, 1
          %s321 = smul.addr %s320, 8
          %s322 = scalar_lea.vmem [#allocation4], %s321
          %s324 = ssub.s32 128, 128
          %325 = vsyncadd %s319, %s324
          %s326 = smul.addr %s30, 128
          %s327 = scalar_lea.hbm %s1, %s326
          %s329 = sshll.u32 %s322, 4
          %s330 = int_to_ptr.vmem [resolvable:$true] %s329
          %332 = dma.hbm_to_vmem [thread:$0]  %s327, 128, %s330, %s319
        $region52: #{tpu_custom_call.1} parent=43 // pred_fallthru
          _
      $region44: #{tpu_custom_call.1} parent=5 // pred_fallthru
        _
      %p333 = scmp.le.s32.totalorder 1, %s23
      %p334 = scmp.lt.s32.totalorder %s23, 3
      %p335 = pnand %p333, %p334
      %p336 = pneg %p335
      // Predicated region
      $region53: #{tpu_custom_call.1} parent=5 // pred_check
        _
      $region54: #{tpu_custom_call.1} parent=5 // pred_check_branch
        %338 = sbr.rel (%p335) target = $region56
      $region55: #{tpu_custom_call.1} parent=5 // pred_region
        %s339 = ssub.s32 %s23, 1
        %s340 = sand.u32 %s76, 1
        %s341 = scalar_lea.sflag [#allocation5], %s340
        %s342 = sand.u32 %s76, 1
        %s343 = smul.addr %s342, 8
        %s344 = scalar_lea.vmem [#allocation4], %s343
        // Predicated region
        $region57: #{tpu_custom_call.1} parent=55 // pred_check
          %p345 = pneg %p89
        $region58: #{tpu_custom_call.1} parent=55 // pred_check_branch
          %347 = sbr.rel (%p345) target = $region60
        $region59: #{tpu_custom_call.1} parent=55 // pred_region
          %348 = dma.done %s341, 128
        $region60: #{tpu_custom_call.1} parent=55 // pred_fallthru
          _
        %p349 = scmp.lt.s32.totalorder %s32, 1
        %s350 = scalar_select %p349, %s32, 1
        %p351 = scmp.lt.s32.totalorder %s33, 0
        %s352 = scalar_select %p351, %s33, 0
        %s353 = smul.addr %s350, 2
        %s354 = sadd.s32 %s352, %s353
        %s355 = smul.addr %s354, 4
        %s356 = scalar_lea.vmem %s0, %s355
        %p357 = pneg %p63
        %p358 = pneg %p60
        %s359 = sand.u32 %s76, 1
        %s360 = scalar_lea.sflag [#allocation5], %s359
        %s361 = sand.u32 %s76, 1
        %s362 = smul.addr %s361, 8
        %s363 = scalar_lea.vmem [#allocation4], %s362
        %p364 = pneg %p89
        %p365 = pneg %p86
        %p366 = pneg %p110
        %p367 = pneg %p107
        %p368 = pneg %p131
        %p369 = pneg %p128
        %p370 = pneg %p152
        %p371 = pneg %p149
        %p372 = pneg %p173
        %p373 = pneg %p170
        %p374 = pneg %p194
        %p375 = pneg %p191
        %p376 = pneg %p215
        %p377 = pneg %p212
        %p378 = pneg %p236
        %p379 = pneg %p233
        %p380 = pneg %p264
        %p381 = pneg %p261
        %s382 = sand.u32 %s251, 1
        %s383 = scalar_lea.sflag [#allocation6], %s382
        %s384 = sand.u32 %s251, 1
        %s385 = scalar_lea.vmem [#allocation7], %s384
        %p386 = scmp.lt.s32.totalorder %s32, 1
        %s387 = scalar_select %p386, %s32, 1
        %p388 = scmp.lt.s32.totalorder %s33, 0
        %s389 = scalar_select %p388, %s33, 0
        %s390 = smul.addr %s387, 2
        %s391 = sadd.s32 %s389, %s390
        %s392 = smul.addr %s391, 4
        %s393 = scalar_lea.vmem %s0, %s392
        %p395 = scmp.eq.s32.totalorder %s33, 0
        // Predicated region
        $region61: #{tpu_custom_call.1} parent=55 // pred_check
          %p396 = pneg %p395
        $region62: #{tpu_custom_call.1} parent=55 // pred_check_branch
          %398 = sbr.rel (%p396) target = $region64
        $region63: #{tpu_custom_call.1} parent=55 // pred_region
          %v399 = vld [vmem:[%s3] sm:$0xf]
          %v400 = vld [vmem:[%s344] sm:$0xff]
          %v401 = vld [vmem:[%s4] sm:$0xf]
          %403 = vset.pattern.permute.xlu0 0
          %404 = vperm.xlu0 %403, %v401
          %v405 = vpop.permute.xlu0 %404
          %vm407 = vcmask 64512
          %v409 = vsel %vm407, %v399, 0
          %411 = vmatprep.subr.mxu0 0.0
          %412 = vmatpush1.msra.mxu0 %v400
          %413 = vmatprep.subr.mxu0 0.0
          %414 = vmatpush1.msra.mxu0 0.0
          %415 = vmatprep.subr.mxu0 0.0
          %416 = vmatpush1.msra.mxu0 0.0
          %417 = vmatprep.subr.mxu0 0.0
          %418 = vmatpush1.msra.mxu0 0.0
          %419 = vmatprep.subr.mxu0 0.0
          %420 = vmatpush1.msra.mxu0 0.0
          %421 = vmatprep.subr.mxu0 0.0
          %422 = vmatpush1.msra.mxu0 0.0
          %423 = vmatprep.subr.mxu0 0.0
          %424 = vmatpush1.msra.mxu0 0.0
          %425 = vmatprep.subr.mxu0 0.0
          %426 = vmatpush1.msra.mxu0 0.0
          %427 = vmatprep.subr.mxu0 0.0
          %428 = vmatpush1.msra.mxu0 0.0
          %429 = vmatprep.subr.mxu0 0.0
          %430 = vmatpush1.msra.mxu0 0.0
          %431 = vmatprep.subr.mxu0 0.0
          %432 = vmatpush1.msra.mxu0 0.0
          %433 = vmatprep.subr.mxu0 0.0
          %434 = vmatpush1.msra.mxu0 0.0
          %435 = vmatprep.subr.mxu0 0.0
          %436 = vmatpush1.msra.mxu0 0.0
          %437 = vmatprep.subr.mxu0 0.0
          %438 = vmatpush1.msra.mxu0 0.0
          %439 = vmatprep.subr.mxu0 0.0
          %440 = vmatpush1.msra.mxu0 0.0
          %441 = vmatprep.subr.mxu0 0.0
          %442 = vmatpush1.msra.mxu0 0.0
          %443 = vmatprep.subr.mxu0 0.0
          %444 = vmatpush1.msra.mxu0 0.0
          %445 = vmatprep.subr.mxu0 0.0
          %446 = vmatpush1.msra.mxu0 0.0
          %447 = vmatprep.subr.mxu0 0.0
          %448 = vmatpush1.msra.mxu0 0.0
          %449 = vmatprep.subr.mxu0 0.0
          %450 = vmatpush1.msra.mxu0 0.0
          %451 = vmatprep.subr.mxu0 0.0
          %452 = vmatpush1.msra.mxu0 0.0
          %453 = vmatprep.subr.mxu0 0.0
          %454 = vmatpush1.msra.mxu0 0.0
          %455 = vmatprep.subr.mxu0 0.0
          %456 = vmatpush1.msra.mxu0 0.0
          %457 = vmatprep.subr.mxu0 0.0
          %458 = vmatpush1.msra.mxu0 0.0
          %459 = vmatprep.subr.mxu0 0.0
          %460 = vmatpush1.msra.mxu0 0.0
          %461 = vmatprep.subr.mxu0 0.0
          %462 = vmatpush1.msra.mxu0 0.0
          %463 = vmatprep.subr.mxu0 0.0
          %464 = vmatpush1.msra.mxu0 0.0
          %465 = vmatprep.subr.mxu0 0.0
          %466 = vmatpush1.msra.mxu0 0.0
          %467 = vmatprep.subr.mxu0 0.0
          %468 = vmatpush1.msra.mxu0 0.0
          %469 = vmatprep.subr.mxu0 0.0
          %470 = vmatpush1.msra.mxu0 0.0
          %471 = vmatprep.subr.mxu0 0.0
          %472 = vmatpush1.msra.mxu0 0.0
          %473 = vmatprep.subr.mxu0 0.0
          %474 = vmatpush1.msra.mxu0 0.0
          %475 = vmatprep.mubr.f32.mxu0 0.0
          %476 = vmatmul.mubr.f32.gmra.mrb[0].mxu0 %v409
          %v477 = vpop.f32.mrb[0].mxu0
          %v478 = vadd.f32 %v405, %v477
          %v479 = vpop.f32.mrb[0].mxu0
          %480 = vdwg.mxu0
          %v481 = vld [vmem:[%s8] sm:$0xf]
          %vm482 = vcmask 31744
          %v484 = vsel %vm482, %v478, 0
          %vm486 = vcmask 1043456
          %v488 = vsel %vm486, %v481, 0
          %490 = vmatprep.subr.mxu0 0.0
          %491 = vmatpush1.msra.mxu0 %v488
          %492 = vmatprep.subr.mxu0 0.0
          %493 = vmatpush1.msra.mxu0 0.0
          %494 = vmatprep.subr.mxu0 0.0
          %495 = vmatpush1.msra.mxu0 0.0
          %496 = vmatprep.subr.mxu0 0.0
          %497 = vmatpush1.msra.mxu0 0.0
          %498 = vmatprep.subr.mxu0 0.0
          %499 = vmatpush1.msra.mxu0 0.0
          %500 = vmatprep.subr.mxu0 0.0
          %501 = vmatpush1.msra.mxu0 0.0
          %502 = vmatprep.subr.mxu0 0.0
          %503 = vmatpush1.msra.mxu0 0.0
          %504 = vmatprep.subr.mxu0 0.0
          %505 = vmatpush1.msra.mxu0 0.0
          %506 = vmatprep.subr.mxu0 0.0
          %507 = vmatpush1.msra.mxu0 0.0
          %508 = vmatprep.subr.mxu0 0.0
          %509 = vmatpush1.msra.mxu0 0.0
          %510 = vmatprep.subr.mxu0 0.0
          %511 = vmatpush1.msra.mxu0 0.0
          %512 = vmatprep.subr.mxu0 0.0
          %513 = vmatpush1.msra.mxu0 0.0
          %514 = vmatprep.subr.mxu0 0.0
          %515 = vmatpush1.msra.mxu0 0.0
          %516 = vmatprep.subr.mxu0 0.0
          %517 = vmatpush1.msra.mxu0 0.0
          %518 = vmatprep.subr.mxu0 0.0
          %519 = vmatpush1.msra.mxu0 0.0
          %520 = vmatprep.subr.mxu0 0.0
          %521 = vmatpush1.msra.mxu0 0.0
          %522 = vmatprep.subr.mxu0 0.0
          %523 = vmatpush1.msra.mxu0 0.0
          %524 = vmatprep.subr.mxu0 0.0
          %525 = vmatpush1.msra.mxu0 0.0
          %526 = vmatprep.subr.mxu0 0.0
          %527 = vmatpush1.msra.mxu0 0.0
          %528 = vmatprep.subr.mxu0 0.0
          %529 = vmatpush1.msra.mxu0 0.0
          %530 = vmatprep.subr.mxu0 0.0
          %531 = vmatpush1.msra.mxu0 0.0
          %532 = vmatprep.subr.mxu0 0.0
          %533 = vmatpush1.msra.mxu0 0.0
          %534 = vmatprep.subr.mxu0 0.0
          %535 = vmatpush1.msra.mxu0 0.0
          %536 = vmatprep.subr.mxu0 0.0
          %537 = vmatpush1.msra.mxu0 0.0
          %538 = vmatprep.subr.mxu0 0.0
          %539 = vmatpush1.msra.mxu0 0.0
          %540 = vmatprep.subr.mxu0 0.0
          %541 = vmatpush1.msra.mxu0 0.0
          %542 = vmatprep.subr.mxu0 0.0
          %543 = vmatpush1.msra.mxu0 0.0
          %544 = vmatprep.subr.mxu0 0.0
          %545 = vmatpush1.msra.mxu0 0.0
          %546 = vmatprep.subr.mxu0 0.0
          %547 = vmatpush1.msra.mxu0 0.0
          %548 = vmatprep.subr.mxu0 0.0
          %549 = vmatpush1.msra.mxu0 0.0
          %550 = vmatprep.subr.mxu0 0.0
          %551 = vmatpush1.msra.mxu0 0.0
          %552 = vmatprep.subr.mxu0 0.0
          %553 = vmatpush1.msra.mxu0 0.0
          %554 = vmatprep.mubr.f32.mxu0 0.0
          %555 = vmatmul.mubr.f32.gmra.mrb[0].mxu0 %v484
          %v556 = vpop.f32.mrb[0].mxu0
          %v557 = vadd.f32 0.0, %v556
          %v558 = vpop.f32.mrb[0].mxu0
          %559 = vdwg.mxu0
          %vm560 = vcmask 60416
          %561 = vst.msk [vmem:[#allocation2] sm:$0xf] %vm560, %v557
          %v562 = vld [vmem:[%s8] sm:$0xf]
          %563 = vrot.lane.b32.xlu0 %v478, 124
          %v564 = vpop.permute.xlu0 %563
          %v565 = vsel %vm482, %v564, 0
          %v568 = vsel %vm486, %v562, 0
          %570 = vmatprep.subr.mxu0 0.0
          %571 = vmatpush1.msra.mxu0 %v568
          %572 = vmatprep.subr.mxu0 0.0
          %573 = vmatpush1.msra.mxu0 0.0
          %574 = vmatprep.subr.mxu0 0.0
          %575 = vmatpush1.msra.mxu0 0.0
          %576 = vmatprep.subr.mxu0 0.0
          %577 = vmatpush1.msra.mxu0 0.0
          %578 = vmatprep.subr.mxu0 0.0
          %579 = vmatpush1.msra.mxu0 0.0
          %580 = vmatprep.subr.mxu0 0.0
          %581 = vmatpush1.msra.mxu0 0.0
          %582 = vmatprep.subr.mxu0 0.0
          %583 = vmatpush1.msra.mxu0 0.0
          %584 = vmatprep.subr.mxu0 0.0
          %585 = vmatpush1.msra.mxu0 0.0
          %586 = vmatprep.subr.mxu0 0.0
          %587 = vmatpush1.msra.mxu0 0.0
          %588 = vmatprep.subr.mxu0 0.0
          %589 = vmatpush1.msra.mxu0 0.0
          %590 = vmatprep.subr.mxu0 0.0
          %591 = vmatpush1.msra.mxu0 0.0
          %592 = vmatprep.subr.mxu0 0.0
          %593 = vmatpush1.msra.mxu0 0.0
          %594 = vmatprep.subr.mxu0 0.0
          %595 = vmatpush1.msra.mxu0 0.0
          %596 = vmatprep.subr.mxu0 0.0
          %597 = vmatpush1.msra.mxu0 0.0
          %598 = vmatprep.subr.mxu0 0.0
          %599 = vmatpush1.msra.mxu0 0.0
          %600 = vmatprep.subr.mxu0 0.0
          %601 = vmatpush1.msra.mxu0 0.0
          %602 = vmatprep.subr.mxu0 0.0
          %603 = vmatpush1.msra.mxu0 0.0
          %604 = vmatprep.subr.mxu0 0.0
          %605 = vmatpush1.msra.mxu0 0.0
          %606 = vmatprep.subr.mxu0 0.0
          %607 = vmatpush1.msra.mxu0 0.0
          %608 = vmatprep.subr.mxu0 0.0
          %609 = vmatpush1.msra.mxu0 0.0
          %610 = vmatprep.subr.mxu0 0.0
          %611 = vmatpush1.msra.mxu0 0.0
          %612 = vmatprep.subr.mxu0 0.0
          %613 = vmatpush1.msra.mxu0 0.0
          %614 = vmatprep.subr.mxu0 0.0
          %615 = vmatpush1.msra.mxu0 0.0
          %616 = vmatprep.subr.mxu0 0.0
          %617 = vmatpush1.msra.mxu0 0.0
          %618 = vmatprep.subr.mxu0 0.0
          %619 = vmatpush1.msra.mxu0 0.0
          %620 = vmatprep.subr.mxu0 0.0
          %621 = vmatpush1.msra.mxu0 0.0
          %622 = vmatprep.subr.mxu0 0.0
          %623 = vmatpush1.msra.mxu0 0.0
          %624 = vmatprep.subr.mxu0 0.0
          %625 = vmatpush1.msra.mxu0 0.0
          %626 = vmatprep.subr.mxu0 0.0
          %627 = vmatpush1.msra.mxu0 0.0
          %628 = vmatprep.subr.mxu0 0.0
          %629 = vmatpush1.msra.mxu0 0.0
          %630 = vmatprep.subr.mxu0 0.0
          %631 = vmatpush1.msra.mxu0 0.0
          %632 = vmatprep.subr.mxu0 0.0
          %633 = vmatpush1.msra.mxu0 0.0
          %634 = vmatprep.mubr.f32.mxu0 0.0
          %635 = vmatmul.mubr.f32.gmra.mrb[0].mxu0 %v565
          %v636 = vpop.f32.mrb[0].mxu0
          %v637 = vadd.f32 0.0, %v636
          %v638 = vpop.f32.mrb[0].mxu0
          %639 = vdwg.mxu0
          %s640 = scalar_lea.vmem [#allocation2], 4
          %641 = vst.msk [vmem:[%s640] sm:$0xf] %vm560, %v637
          %v642 = vld [vmem:[%s8] sm:$0xf]
          %643 = vrot.lane.b32.xlu0 %v478, 120
          %v644 = vpop.permute.xlu0 %643
          %v645 = vsel %vm482, %v644, 0
          %v648 = vsel %vm486, %v642, 0
          %650 = vmatprep.subr.mxu0 0.0
          %651 = vmatpush1.msra.mxu0 %v648
          %652 = vmatprep.subr.mxu0 0.0
          %653 = vmatpush1.msra.mxu0 0.0
          %654 = vmatprep.subr.mxu0 0.0
          %655 = vmatpush1.msra.mxu0 0.0
          %656 = vmatprep.subr.mxu0 0.0
          %657 = vmatpush1.msra.mxu0 0.0
          %658 = vmatprep.subr.mxu0 0.0
          %659 = vmatpush1.msra.mxu0 0.0
          %660 = vmatprep.subr.mxu0 0.0
          %661 = vmatpush1.msra.mxu0 0.0
          %662 = vmatprep.subr.mxu0 0.0
          %663 = vmatpush1.msra.mxu0 0.0
          %664 = vmatprep.subr.mxu0 0.0
          %665 = vmatpush1.msra.mxu0 0.0
          %666 = vmatprep.subr.mxu0 0.0
          %667 = vmatpush1.msra.mxu0 0.0
          %668 = vmatprep.subr.mxu0 0.0
          %669 = vmatpush1.msra.mxu0 0.0
          %670 = vmatprep.subr.mxu0 0.0
          %671 = vmatpush1.msra.mxu0 0.0
          %672 = vmatprep.subr.mxu0 0.0
          %673 = vmatpush1.msra.mxu0 0.0
          %674 = vmatprep.subr.mxu0 0.0
          %675 = vmatpush1.msra.mxu0 0.0
          %676 = vmatprep.subr.mxu0 0.0
          %677 = vmatpush1.msra.mxu0 0.0
          %678 = vmatprep.subr.mxu0 0.0
          %679 = vmatpush1.msra.mxu0 0.0
          %680 = vmatprep.subr.mxu0 0.0
          %681 = vmatpush1.msra.mxu0 0.0
          %682 = vmatprep.subr.mxu0 0.0
          %683 = vmatpush1.msra.mxu0 0.0
          %684 = vmatprep.subr.mxu0 0.0
          %685 = vmatpush1.msra.mxu0 0.0
          %686 = vmatprep.subr.mxu0 0.0
          %687 = vmatpush1.msra.mxu0 0.0
          %688 = vmatprep.subr.mxu0 0.0
          %689 = vmatpush1.msra.mxu0 0.0
          %690 = vmatprep.subr.mxu0 0.0
          %691 = vmatpush1.msra.mxu0 0.0
          %692 = vmatprep.subr.mxu0 0.0
          %693 = vmatpush1.msra.mxu0 0.0
          %694 = vmatprep.subr.mxu0 0.0
          %695 = vmatpush1.msra.mxu0 0.0
          %696 = vmatprep.subr.mxu0 0.0
          %697 = vmatpush1.msra.mxu0 0.0
          %698 = vmatprep.subr.mxu0 0.0
          %699 = vmatpush1.msra.mxu0 0.0
          %700 = vmatprep.subr.mxu0 0.0
          %701 = vmatpush1.msra.mxu0 0.0
          %702 = vmatprep.subr.mxu0 0.0
          %703 = vmatpush1.msra.mxu0 0.0
          %704 = vmatprep.subr.mxu0 0.0
          %705 = vmatpush1.msra.mxu0 0.0
          %706 = vmatprep.subr.mxu0 0.0
          %707 = vmatpush1.msra.mxu0 0.0
          %708 = vmatprep.subr.mxu0 0.0
          %709 = vmatpush1.msra.mxu0 0.0
          %710 = vmatprep.subr.mxu0 0.0
          %711 = vmatpush1.msra.mxu0 0.0
          %712 = vmatprep.subr.mxu0 0.0
          %713 = vmatpush1.msra.mxu0 0.0
          %714 = vmatprep.mubr.f32.mxu0 0.0
          %715 = vmatmul.mubr.f32.gmra.mrb[0].mxu0 %v645
          %v716 = vpop.f32.mrb[0].mxu0
          %v717 = vadd.f32 0.0, %v716
          %v718 = vpop.f32.mrb[0].mxu0
          %719 = vdwg.mxu0
          %s720 = scalar_lea.vmem [#allocation2], 8
          %721 = vst.msk [vmem:[%s720] sm:$0xf] %vm560, %v717
          %v722 = vld [vmem:[%s8] sm:$0xf]
          %723 = vrot.lane.b32.xlu0 %v478, 116
          %v724 = vpop.permute.xlu0 %723
          %v725 = vsel %vm482, %v724, 0
          %v728 = vsel %vm486, %v722, 0
          %730 = vmatprep.subr.mxu0 0.0
          %731 = vmatpush1.msra.mxu0 %v728
          %732 = vmatprep.subr.mxu0 0.0
          %733 = vmatpush1.msra.mxu0 0.0
          %734 = vmatprep.subr.mxu0 0.0
          %735 = vmatpush1.msra.mxu0 0.0
          %736 = vmatprep.subr.mxu0 0.0
          %737 = vmatpush1.msra.mxu0 0.0
          %738 = vmatprep.subr.mxu0 0.0
          %739 = vmatpush1.msra.mxu0 0.0
          %740 = vmatprep.subr.mxu0 0.0
          %741 = vmatpush1.msra.mxu0 0.0
          %742 = vmatprep.subr.mxu0 0.0
          %743 = vmatpush1.msra.mxu0 0.0
          %744 = vmatprep.subr.mxu0 0.0
          %745 = vmatpush1.msra.mxu0 0.0
          %746 = vmatprep.subr.mxu0 0.0
          %747 = vmatpush1.msra.mxu0 0.0
          %748 = vmatprep.subr.mxu0 0.0
          %749 = vmatpush1.msra.mxu0 0.0
          %750 = vmatprep.subr.mxu0 0.0
          %751 = vmatpush1.msra.mxu0 0.0
          %752 = vmatprep.subr.mxu0 0.0
          %753 = vmatpush1.msra.mxu0 0.0
          %754 = vmatprep.subr.mxu0 0.0
          %755 = vmatpush1.msra.mxu0 0.0
          %756 = vmatprep.subr.mxu0 0.0
          %757 = vmatpush1.msra.mxu0 0.0
          %758 = vmatprep.subr.mxu0 0.0
          %759 = vmatpush1.msra.mxu0 0.0
          %760 = vmatprep.subr.mxu0 0.0
          %761 = vmatpush1.msra.mxu0 0.0
          %762 = vmatprep.subr.mxu0 0.0
          %763 = vmatpush1.msra.mxu0 0.0
          %764 = vmatprep.subr.mxu0 0.0
          %765 = vmatpush1.msra.mxu0 0.0
          %766 = vmatprep.subr.mxu0 0.0
          %767 = vmatpush1.msra.mxu0 0.0
          %768 = vmatprep.subr.mxu0 0.0
          %769 = vmatpush1.msra.mxu0 0.0
          %770 = vmatprep.subr.mxu0 0.0
          %771 = vmatpush1.msra.mxu0 0.0
          %772 = vmatprep.subr.mxu0 0.0
          %773 = vmatpush1.msra.mxu0 0.0
          %774 = vmatprep.subr.mxu0 0.0
          %775 = vmatpush1.msra.mxu0 0.0
          %776 = vmatprep.subr.mxu0 0.0
          %777 = vmatpush1.msra.mxu0 0.0
          %778 = vmatprep.subr.mxu0 0.0
          %779 = vmatpush1.msra.mxu0 0.0
          %780 = vmatprep.subr.mxu0 0.0
          %781 = vmatpush1.msra.mxu0 0.0
          %782 = vmatprep.subr.mxu0 0.0
          %783 = vmatpush1.msra.mxu0 0.0
          %784 = vmatprep.subr.mxu0 0.0
          %785 = vmatpush1.msra.mxu0 0.0
          %786 = vmatprep.subr.mxu0 0.0
          %787 = vmatpush1.msra.mxu0 0.0
          %788 = vmatprep.subr.mxu0 0.0
          %789 = vmatpush1.msra.mxu0 0.0
          %790 = vmatprep.subr.mxu0 0.0
          %791 = vmatpush1.msra.mxu0 0.0
          %792 = vmatprep.subr.mxu0 0.0
          %793 = vmatpush1.msra.mxu0 0.0
          %794 = vmatprep.mubr.f32.mxu0 0.0
          %795 = vmatmul.mubr.f32.gmra.mrb[0].mxu0 %v725
          %v796 = vpop.f32.mrb[0].mxu0
          %v797 = vadd.f32 0.0, %v796
          %v798 = vpop.f32.mrb[0].mxu0
          %799 = vdwg.mxu0
          %s800 = scalar_lea.vmem [#allocation2], 12
          %801 = vst.msk [vmem:[%s800] sm:$0xf] %vm560, %v797
        $region64: #{tpu_custom_call.1} parent=55 // pred_fallthru
          _
        %v802 = vld [vmem:[%s2] sm:$0x3]
        %v803 = vld [vmem:[%s393] sm:$0xf]
        %v804 = vld [vmem:[%s393 + $0x4] sm:$0xf]
        %s805 = smul.u32 %s33, 8
        %s806 = scalar_lea.vmem %s7, %s805
        %v807 = vld [vmem:[%s806] sm:$0xff]
        %v808 = vld [vmem:[#allocation2] sm:$0xf]
        %v811 = vunpack.c.l.s4 1966171168
        %v812 = vunpack.c.0.s8 %v811
        %v813 = vlaneseq
        %v814 = vshrl.u32 %v813, 7
        %v815 = vsub.s32 %v812, %v814
        %v816 = vrot.slane %v808, %v815
        %v817 = vcombine.high %v816, %v816
        %v819 = vunpack.c.l.s4 1966171168
        %v820 = vunpack.c.0.s8 %v819
        %v821 = vlaneseq
        %v822 = vshrl.u32 %v821, 7
        %v823 = vsub.s32 %v820, %v822
        %v824 = vrot.slane %v816, %v823
        %v826 = vunpack.c.l.s4 1966171168
        %v827 = vunpack.c.0.s8 %v826
        %v828 = vlaneseq
        %v829 = vshrl.u32 %v828, 7
        %v830 = vsub.s32 %v827, %v829
        %v831 = vrot.slane %v817, %v830
        %v832 = vcombine.high %v824, %v824
        %v833 = vcombine.high %v831, %v831
        %835 = vset.pattern.permute.xlu0 0
        %836 = vperm.xlu0 %835, %v807
        %v837 = vpop.permute.xlu0 %836
        %v839 = vlaneseq
        %v840 = vshrl.u32 %v839, 7
        %v841 = vsub.s32 0, %v840
        %v842 = vrot.slane %v824, %v841
        %v843 = vlaneseq
        %v844 = vshrl.u32 %v843, 7
        %v845 = vsub.s32 0, %v844
        %v846 = vrot.slane %v831, %v845
        %v847 = vlaneseq
        %v848 = vshrl.u32 %v847, 7
        %v849 = vsub.s32 0, %v848
        %v850 = vrot.slane %v832, %v849
        %v851 = vlaneseq
        %v852 = vshrl.u32 %v851, 7
        %v853 = vsub.s32 0, %v852
        %v854 = vrot.slane %v833, %v853
        %v859 = vmul.f32 %v837, %v842
        %v860 = vmul.f32 %v837, %v846
        %v861 = vmul.f32 %v837, %v850
        %v862 = vmul.f32 %v837, %v854
        %v863 = vadd.f32 %v859, 0.0
        %v864 = vadd.f32 %v860, 0.0
        %v865 = vadd.f32 %v861, 0.0
        %v866 = vadd.f32 %v862, 0.0
        %s867 = scalar_lea.vmem [#allocation2], 4
        %v868 = vld [vmem:[%s867] sm:$0xf]
        %v871 = vunpack.c.l.s4 1966171168
        %v872 = vunpack.c.0.s8 %v871
        %v873 = vlaneseq
        %v874 = vshrl.u32 %v873, 7
        %v875 = vsub.s32 %v872, %v874
        %v876 = vrot.slane %v868, %v875
        %v877 = vcombine.high %v876, %v876
        %v879 = vunpack.c.l.s4 1966171168
        %v880 = vunpack.c.0.s8 %v879
        %v881 = vlaneseq
        %v882 = vshrl.u32 %v881, 7
        %v883 = vsub.s32 %v880, %v882
        %v884 = vrot.slane %v876, %v883
        %v886 = vunpack.c.l.s4 1966171168
        %v887 = vunpack.c.0.s8 %v886
        %v888 = vlaneseq
        %v889 = vshrl.u32 %v888, 7
        %v890 = vsub.s32 %v887, %v889
        %v891 = vrot.slane %v877, %v890
        %v892 = vcombine.high %v884, %v884
        %v893 = vcombine.high %v891, %v891
        %894 = vset.pattern.permute.xlu0 1
        %895 = vperm.xlu0 %894, %v807
        %v896 = vpop.permute.xlu0 %895
        %v898 = vlaneseq
        %v899 = vshrl.u32 %v898, 7
        %v900 = vsub.s32 0, %v899
        %v901 = vrot.slane %v884, %v900
        %v902 = vlaneseq
        %v903 = vshrl.u32 %v902, 7
        %v904 = vsub.s32 0, %v903
        %v905 = vrot.slane %v891, %v904
        %v906 = vlaneseq
        %v907 = vshrl.u32 %v906, 7
        %v908 = vsub.s32 0, %v907
        %v909 = vrot.slane %v892, %v908
        %v910 = vlaneseq
        %v911 = vshrl.u32 %v910, 7
        %v912 = vsub.s32 0, %v911
        %v913 = vrot.slane %v893, %v912
        %v918 = vmul.f32 %v896, %v901
        %v919 = vmul.f32 %v896, %v905
        %v920 = vmul.f32 %v896, %v909
        %v921 = vmul.f32 %v896, %v913
        %v922 = vadd.f32 %v863, %v918
        %v923 = vadd.f32 %v864, %v919
        %v924 = vadd.f32 %v865, %v920
        %v925 = vadd.f32 %v866, %v921
        %s926 = scalar_lea.vmem [#allocation2], 8
        %v927 = vld [vmem:[%s926] sm:$0xf]
        %v930 = vunpack.c.l.s4 1966171168
        %v931 = vunpack.c.0.s8 %v930
        %v932 = vlaneseq
        %v933 = vshrl.u32 %v932, 7
        %v934 = vsub.s32 %v931, %v933
        %v935 = vrot.slane %v927, %v934
        %v936 = vcombine.high %v935, %v935
        %v938 = vunpack.c.l.s4 1966171168
        %v939 = vunpack.c.0.s8 %v938
        %v940 = vlaneseq
        %v941 = vshrl.u32 %v940, 7
        %v942 = vsub.s32 %v939, %v941
        %v943 = vrot.slane %v935, %v942
        %v945 = vunpack.c.l.s4 1966171168
        %v946 = vunpack.c.0.s8 %v945
        %v947 = vlaneseq
        %v948 = vshrl.u32 %v947, 7
        %v949 = vsub.s32 %v946, %v948
        %v950 = vrot.slane %v936, %v949
        %v951 = vcombine.high %v943, %v943
        %v952 = vcombine.high %v950, %v950
        %953 = vset.pattern.permute.xlu0 2
        %954 = vperm.xlu0 %953, %v807
        %v955 = vpop.permute.xlu0 %954
        %v957 = vlaneseq
        %v958 = vshrl.u32 %v957, 7
        %v959 = vsub.s32 0, %v958
        %v960 = vrot.slane %v943, %v959
        %v961 = vlaneseq
        %v962 = vshrl.u32 %v961, 7
        %v963 = vsub.s32 0, %v962
        %v964 = vrot.slane %v950, %v963
        %v965 = vlaneseq
        %v966 = vshrl.u32 %v965, 7
        %v967 = vsub.s32 0, %v966
        %v968 = vrot.slane %v951, %v967
        %v969 = vlaneseq
        %v970 = vshrl.u32 %v969, 7
        %v971 = vsub.s32 0, %v970
        %v972 = vrot.slane %v952, %v971
        %v977 = vmul.f32 %v955, %v960
        %v978 = vmul.f32 %v955, %v964
        %v979 = vmul.f32 %v955, %v968
        %v980 = vmul.f32 %v955, %v972
        %v981 = vadd.f32 %v922, %v977
        %v982 = vadd.f32 %v923, %v978
        %v983 = vadd.f32 %v924, %v979
        %v984 = vadd.f32 %v925, %v980
        %s985 = scalar_lea.vmem [#allocation2], 12
        %v986 = vld [vmem:[%s985] sm:$0xf]
        %v989 = vunpack.c.l.s4 1966171168
        %v990 = vunpack.c.0.s8 %v989
        %v991 = vlaneseq
        %v992 = vshrl.u32 %v991, 7
        %v993 = vsub.s32 %v990, %v992
        %v994 = vrot.slane %v986, %v993
        %v995 = vcombine.high %v994, %v994
        %v997 = vunpack.c.l.s4 1966171168
        %v998 = vunpack.c.0.s8 %v997
        %v999 = vlaneseq
        %v1000 = vshrl.u32 %v999, 7
        %v1001 = vsub.s32 %v998, %v1000
        %v1002 = vrot.slane %v994, %v1001
        %v1004 = vunpack.c.l.s4 1966171168
        %v1005 = vunpack.c.0.s8 %v1004
        %v1006 = vlaneseq
        %v1007 = vshrl.u32 %v1006, 7
        %v1008 = vsub.s32 %v1005, %v1007
        %v1009 = vrot.slane %v995, %v1008
        %v1010 = vcombine.high %v1002, %v1002
        %v1011 = vcombine.high %v1009, %v1009
        %1012 = vset.pattern.permute.xlu0 3
        %1013 = vperm.xlu0 %1012, %v807
        %v1014 = vpop.permute.xlu0 %1013
        %v1016 = vlaneseq
        %v1017 = vshrl.u32 %v1016, 7
        %v1018 = vsub.s32 0, %v1017
        %v1019 = vrot.slane %v1002, %v1018
        %v1020 = vlaneseq
        %v1021 = vshrl.u32 %v1020, 7
        %v1022 = vsub.s32 0, %v1021
        %v1023 = vrot.slane %v1009, %v1022
        %v1024 = vlaneseq
        %v1025 = vshrl.u32 %v1024, 7
        %v1026 = vsub.s32 0, %v1025
        %v1027 = vrot.slane %v1010, %v1026
        %v1028 = vlaneseq
        %v1029 = vshrl.u32 %v1028, 7
        %v1030 = vsub.s32 0, %v1029
        %v1031 = vrot.slane %v1011, %v1030
        %v1036 = vmul.f32 %v1014, %v1019
        %v1037 = vmul.f32 %v1014, %v1023
        %v1038 = vmul.f32 %v1014, %v1027
        %v1039 = vmul.f32 %v1014, %v1031
        %v1040 = vadd.f32 %v981, %v1036
        %v1041 = vadd.f32 %v982, %v1037
        %v1042 = vadd.f32 %v983, %v1038
        %v1043 = vadd.f32 %v984, %v1039
        %v1044 = vcombine.low %v1040, %v1042
        %v1045 = vcombine.high %v1040, %v1042
        %v1047 = vunpack.c.l.s4 1983009808
        %v1048 = vunpack.c.0.s8 %v1047
        %v1049 = vlaneseq
        %v1050 = vshrl.u32 %v1049, 7
        %v1051 = vsub.s32 %v1048, %v1050
        %v1052 = vrot.slane %v1044, %v1051
        %v1054 = vunpack.c.l.s4 1983009808
        %v1055 = vunpack.c.0.s8 %v1054
        %v1056 = vlaneseq
        %v1057 = vshrl.u32 %v1056, 7
        %v1058 = vsub.s32 %v1055, %v1057
        %v1059 = vrot.slane %v1045, %v1058
        %v1060 = vcombine.low %v1041, %v1043
        %v1061 = vcombine.high %v1041, %v1043
        %v1063 = vunpack.c.l.s4 1983009808
        %v1064 = vunpack.c.0.s8 %v1063
        %v1065 = vlaneseq
        %v1066 = vshrl.u32 %v1065, 7
        %v1067 = vsub.s32 %v1064, %v1066
        %v1068 = vrot.slane %v1060, %v1067
        %v1070 = vunpack.c.l.s4 1983009808
        %v1071 = vunpack.c.0.s8 %v1070
        %v1072 = vlaneseq
        %v1073 = vshrl.u32 %v1072, 7
        %v1074 = vsub.s32 %v1071, %v1073
        %v1075 = vrot.slane %v1061, %v1074
        %v1076 = vcombine.low %v1052, %v1068
        %v1077 = vcombine.high %v1052, %v1068
        %v1079 = vunpack.c.l.s4 1934713408
        %v1080 = vunpack.c.0.s8 %v1079
        %v1081 = vlaneseq
        %v1082 = vshrl.u32 %v1081, 7
        %v1083 = vsub.s32 %v1080, %v1082
        %v1084 = vrot.slane %v1076, %v1083
        %v1086 = vunpack.c.l.s4 1934713408
        %v1087 = vunpack.c.0.s8 %v1086
        %v1088 = vlaneseq
        %v1089 = vshrl.u32 %v1088, 7
        %v1090 = vsub.s32 %v1087, %v1089
        %v1091 = vrot.slane %v1077, %v1090
        %v1092 = vcombine.low %v1059, %v1075
        %v1093 = vcombine.high %v1059, %v1075
        %v1095 = vunpack.c.l.s4 1934713408
        %v1096 = vunpack.c.0.s8 %v1095
        %v1097 = vlaneseq
        %v1098 = vshrl.u32 %v1097, 7
        %v1099 = vsub.s32 %v1096, %v1098
        %v1100 = vrot.slane %v1092, %v1099
        %v1102 = vunpack.c.l.s4 1934713408
        %v1103 = vunpack.c.0.s8 %v1102
        %v1104 = vlaneseq
        %v1105 = vshrl.u32 %v1104, 7
        %v1106 = vsub.s32 %v1103, %v1105
        %v1107 = vrot.slane %v1093, %v1106
        %v1108 = vcombine.high %v1084, 0.0
        %v1109 = vcombine.high %v1091, 0.0
        %v1110 = vcombine.high %v1100, 0.0
        %v1111 = vcombine.high %v1107, 0.0
        %1113 = vrot.lane.b32.xlu0 %v1108, 8
        %v1114 = vpop.permute.xlu0 %1113
        %1117 = vrot.lane.b32.xlu0 %v1091, 16
        %v1118 = vpop.permute.xlu0 %1117
        %1121 = vrot.lane.b32.xlu0 %v1109, 24
        %v1122 = vpop.permute.xlu0 %1121
        %1125 = vrot.lane.b32.xlu0 %v1100, 32
        %v1126 = vpop.permute.xlu0 %1125
        %1129 = vrot.lane.b32.xlu0 %v1110, 40
        %v1130 = vpop.permute.xlu0 %1129
        %1133 = vrot.lane.b32.xlu0 %v1107, 48
        %v1134 = vpop.permute.xlu0 %1133
        %1137 = vrot.lane.b32.xlu0 %v1111, 56
        %v1138 = vpop.permute.xlu0 %1137
        %vm1140 = vcmask 64512
        %v1141 = vsel %vm1140, %v1084, %v1114
        %vm1142 = vcmask 130048
        %v1143 = vsel %vm1142, %v1141, %v1118
        %vm1144 = vcmask 195584
        %v1145 = vsel %vm1144, %v1143, %v1122
        %vm1146 = vcmask 261120
        %v1147 = vsel %vm1146, %v1145, %v1126
        %vm1148 = vcmask 326656
        %v1149 = vsel %vm1148, %v1147, %v1130
        %vm1150 = vcmask 392192
        %v1151 = vsel %vm1150, %v1149, %v1134
        %vm1152 = vcmask 457728
        %v1153 = vsel %vm1152, %v1151, %v1138
        %v1156 = vunpack.c.l.b16 %v803
        %v1157 = vunpack.c.l.b16 %v804
        %v1158 = vpack.c.b16 %v1157, %v1156
        %v1161 = vsel %vm1142, %v802, 0
        %1163 = vmatprep.subr.bf16.mxu0 0
        %1164 = vmatpush1.bf16.msra.mxu0 %v1158
        %1165 = vmatprep.subr.bf16.mxu0 0
        %1166 = vmatpush1.bf16.msra.mxu0 0
        %1167 = vmatprep.subr.bf16.mxu0 0
        %1168 = vmatpush1.bf16.msra.mxu0 0
        %1169 = vmatprep.subr.bf16.mxu0 0
        %1170 = vmatpush1.bf16.msra.mxu0 0
        %1171 = vmatprep.subr.bf16.mxu0 0
        %1172 = vmatpush1.bf16.msra.mxu0 0
        %1173 = vmatprep.subr.bf16.mxu0 0
        %1174 = vmatpush1.bf16.msra.mxu0 0
        %1175 = vmatprep.subr.bf16.mxu0 0
        %1176 = vmatpush1.bf16.msra.mxu0 0
        %1177 = vmatprep.subr.bf16.mxu0 0
        %1178 = vmatpush1.bf16.msra.mxu0 0
        %1179 = vmatprep.subr.bf16.mxu0 0
        %1180 = vmatpush1.bf16.msra.mxu0 0
        %1181 = vmatprep.subr.bf16.mxu0 0
        %1182 = vmatpush1.bf16.msra.mxu0 0
        %1183 = vmatprep.subr.bf16.mxu0 0
        %1184 = vmatpush1.bf16.msra.mxu0 0
        %1185 = vmatprep.subr.bf16.mxu0 0
        %1186 = vmatpush1.bf16.msra.mxu0 0
        %1187 = vmatprep.subr.bf16.mxu0 0
        %1188 = vmatpush1.bf16.msra.mxu0 0
        %1189 = vmatprep.subr.bf16.mxu0 0
        %1190 = vmatpush1.bf16.msra.mxu0 0
        %1191 = vmatprep.subr.bf16.mxu0 0
        %1192 = vmatpush1.bf16.msra.mxu0 0
        %1193 = vmatprep.subr.bf16.mxu0 0
        %1194 = vmatpush1.bf16.msra.mxu0 0
        %1195 = vmatprep.mubr.bf16.mxu0 0
        %1196 = vmatmul.mubr.bf16.gmra.mrb[0].mxu0 %v1161
        %v1197 = vpop.f32.mrb[0].mxu0
        %v1198 = vadd.f32 %v1153, %v1197
        %v1199 = vpop.f32.mrb[0].mxu0
        %v1200 = vpop.f32.mrb[0].mxu0
        %v1201 = vpop.f32.mrb[0].mxu0
        %1202 = vdwg.mxu0
        %v1203 = vmax.f32 %v1198, 0.0
        %v1204 = vld [vmem:[%s5] sm:$0xf]
        %1206 = vset.pattern.permute.xlu0 0
        %1207 = vperm.xlu0 %1206, %v1204
        %v1208 = vpop.permute.xlu0 %1207
        %v1210 = vmul.f32 %v1208, %v1203
        %vm1211 = vcmask 519168
        %v1212 = vsel %vm1211, %v1210, 0.0
        %v1213 = vrot.slane %v1212, 4
        %v1214 = vadd.f32 %v1212, %v1213
        %v1215 = vrot.slane %v1214, 2
        %v1216 = vadd.f32 %v1214, %v1215
        %v1217 = vrot.slane %v1216, 1
        %v1218 = vadd.f32 %v1216, %v1217
        %v1219 = vld [vmem:[#allocation3] sm:$0x1]
        %1221 = vset.pattern.permute.xlu0 0
        %1222 = vperm.xlu0 %1221, %v1219
        %v1223 = vpop.permute.xlu0 %1222
        %v1225 = vlaneseq
        %v1226 = vshrl.u32 %v1225, 7
        %v1227 = vsub.s32 0, %v1226
        %v1228 = vrot.slane %v1223, %v1227
        %v1229 = vadd.f32 %v1218, %v1228
        %v1230 = vxor.u32 %v1229, 2147483648
        %v1231 = vmul.f32 %v1230, 1.442695
        %v1232 = vpow.pop %v1231
        %v1233 = vadd.f32 %v1232, 1.0
        %v1234 = vrcp.pop %v1233
        %v1235 = vmul.f32 1.0, %v1234
        %vm1236 = vcmask 516096
        %1237 = vst.msk [vmem:[%s385] sm:$0x1] %vm1236, %v1235
        %s1238 = sand.u32 %s251, 1
        %s1239 = scalar_lea.sflag [#allocation6], %s1238
        %s1240 = sand.u32 %s251, 1
        %s1241 = scalar_lea.vmem [#allocation7], %s1240
        // Predicated region
        $region65: #{tpu_custom_call.1} parent=55 // pred_check
          %p1242 = pneg %p261
        $region66: #{tpu_custom_call.1} parent=55 // pred_check_branch
          %1244 = sbr.rel (%p1242) target = $region68
        $region67: #{tpu_custom_call.1} parent=55 // pred_region
          %s1246 = ssub.s32 16, 16
          %1247 = vsyncadd %s1239, %s1246
          %s1248 = sadd.s32 %s33, %s32
          %s1249 = smul.addr %s1248, 16
          %s1250 = scalar_lea.hbm %s9, %s1249
          %s1252 = sshll.u32 %s1241, 4
          %s1253 = int_to_ptr.vmem [resolvable:$true] %s1252
          %1255 = dma.vmem_to_hbm [thread:$0]  %s1253, 16, %s1250, %s1239
        $region68: #{tpu_custom_call.1} parent=55 // pred_fallthru
          _
      $region56: #{tpu_custom_call.1} parent=5 // pred_fallthru
        _
      %p1256 = scmp.le.s32.totalorder 2, %s23
      // Predicated region
      $region69: #{tpu_custom_call.1} parent=5 // pred_check
        %p1257 = pneg %p1256
      $region70: #{tpu_custom_call.1} parent=5 // pred_check_branch
        %1259 = sbr.rel (%p1257) target = $region72
      $region71: #{tpu_custom_call.1} parent=5 // pred_region
        %s1260 = ssub.s32 %s23, 2
        // Predicated region
        $region73: #{tpu_custom_call.1} parent=71 // pred_check
          %p1261 = pneg %p267
        $region74: #{tpu_custom_call.1} parent=71 // pred_check_branch
          %1263 = sbr.rel (%p1261) target = $region76
        $region75: #{tpu_custom_call.1} parent=71 // pred_region
          %s1264 = sand.u32 %s252, 1
          %s1265 = scalar_lea.sflag [#allocation6], %s1264
          %s1266 = sand.u32 %s252, 1
          %s1267 = scalar_lea.vmem [#allocation7], %s1266
          %1268 = dma.done %s1265, 16
        $region76: #{tpu_custom_call.1} parent=71 // pred_fallthru
          _
      $region72: #{tpu_custom_call.1} parent=5 // pred_fallthru
        _
    $region6: #{tpu_custom_call.1} parent=1 // loop_footer
      %s27 = sadd.s32 1, %s23
    $region7: #{tpu_custom_call.1} parent=1 // loop_footer_branch
      %22 = sbr.rel target = $region3
    $region8: #{tpu_custom_call.1} parent=1 // loop_exit
      _
    %1269 = vsyncpa [#allocation5], 1
    %s1270 = scalar_lea.sflag [#allocation5], 1
    %1271 = vsyncpa %s1270, 1
    %1272 = vsyncpa [#allocation6], 1
    %s1273 = scalar_lea.sflag [#allocation6], 1
    %1274 = vsyncpa %s1273, 1

</llo_original>
